<compile_context>
chip_gen: v5e
topology: v5e:2x2
jax: 0.10.0
libtpu: 0.0.40
codegen_flags: <defaults>
</compile_context>

<pallas_src>
import math
import numpy as np
import jax
import jax.numpy as jnp
from jax.experimental import pallas as pl
from jax.experimental.pallas import tpu as pltpu

TT_INPUT_SHAPE = [4, 4, 4, 4, 4, 3]
TT_OUTPUT_SHAPE = [5, 5, 5, 5, 5, 5]
TT_RANKS = [1, 3, 3, 3, 3, 3, 1]


# ---------------------------------------------------------------------------
# Parameter initialization: verbatim numpy port of the PyTorch helper,
# deterministic via a fixed numpy seed (no checkpoint loading).
# ---------------------------------------------------------------------------
def _generate_orthogonal_tt_cores(input_shape, output_shape, ranks):
    input_shape = np.array(input_shape)
    output_shape = np.array(output_shape)
    ranks = np.array(ranks)
    cores_arr_len = np.sum(input_shape * output_shape * ranks[1:] * ranks[:-1])
    cores_arr = np.zeros(cores_arr_len).astype(float)
    cores_arr_idx = 0
    rv = 1
    shapes = list()
    cores_indexes = list()
    for k in range(input_shape.shape[0]):
        shape = [ranks[k], input_shape[k], output_shape[k], ranks[k + 1]]
        shapes.append((input_shape[k] * ranks[k + 1], ranks[k] * output_shape[k]))
        tall_shape = (np.prod(shape[:3]), shape[3])
        curr_core = np.dot(rv, np.random.normal(0, 1, (shape[0], np.prod(shape[1:]))))
        curr_core = curr_core.reshape(tall_shape)
        if k < input_shape.shape[0] - 1:
            curr_core, rv = np.linalg.qr(curr_core)
        cores_arr[cores_arr_idx:cores_arr_idx + curr_core.size] = curr_core.flatten()
        cores_indexes.append((cores_arr_idx, cores_arr_idx + curr_core.size))
        cores_arr_idx += curr_core.size
    glarot_style = (np.prod(input_shape) * np.prod(ranks)) ** (1.0 / input_shape.shape[0])
    cores_arr = 0.1 / glarot_style * cores_arr
    return cores_arr, shapes, cores_indexes


# ---------------------------------------------------------------------------
# Exact merging of consecutive "x.view(B, -1, K) @ W" steps into one matmul.
# ---------------------------------------------------------------------------
def _merged_block_shape(step_shapes):
    K, N = step_shapes[0]
    for (k2, n2) in step_shapes[1:]:
        L = math.lcm(N, k2)
        K, N = (L // N) * K, (L // k2) * n2
    return K, N


def _merge_steps(step_mats):
    """Collapse a sub-chain of `x -> (x.reshape(-1, Ki) @ Wi).ravel()` ops into a
    single (K, N) matrix applied blockwise.  Exact by linearity and block
    shift-invariance of the chain (blocks of size K stay self-contained)."""
    K, N = _merged_block_shape([m.shape for m in step_mats])
    X = np.eye(K, dtype=np.float64)
    for m in step_mats:
        X = (X.reshape(K, -1, m.shape[0]) @ m).reshape(K, -1)
    assert X.shape == (K, N)
    return X


# ---------------------------------------------------------------------------
# Tiling helpers.
# ---------------------------------------------------------------------------
def _pick_row_tile(rows, candidates):
    """Largest candidate tile dividing `rows`, preferring >= 2 grid steps so
    both v7x TensorCores get work under dimension_semantics=("parallel",)."""
    for c in candidates:
        if rows % c == 0 and rows // c >= 2:
            return c
    for c in candidates:
        if rows % c == 0:
            return c
    return rows  # single full-extent block (always legal)


def _vmem_limit_bytes(blocks):
    """Scoped-VMEM request: hw-tile-padded block bytes, double-buffered, +margin."""
    total = 0
    for (rows, cols), dtype in blocks:
        item = jnp.dtype(dtype).itemsize
        sub = max(8, 32 // item)                 # f32: 8 sublanes, bf16: 16
        rp = -(-rows // sub) * sub
        cp = -(-cols // 128) * 128
        total += rp * cp * item
    return int(min(max(2 * total + (4 << 20), 16 << 20), 64 << 20))


# ---------------------------------------------------------------------------
# Pallas kernels: one tall matmul per grid step, weights/bias resident.
# ---------------------------------------------------------------------------
def _stage1_kernel(x_ref, w_ref, o_ref):
    # x_ref: (tm, K1) f32, w_ref: (K1, N1) bf16, o_ref: (tm, N1) bf16
    a = x_ref[...].astype(jnp.bfloat16)
    o_ref[...] = jnp.dot(a, w_ref[...],
                         preferred_element_type=jnp.float32).astype(o_ref.dtype)


def _stage2_bias_kernel(h_ref, w_ref, b_ref, o_ref):
    # h_ref: (tm, K2) bf16, w_ref: (K2, N2) bf16, b_ref/o_ref: (tm, N2) f32
    acc = jnp.dot(h_ref[...], w_ref[...], preferred_element_type=jnp.float32)
    o_ref[...] = acc + b_ref[...]


def _run_stage1(x2, w1, tm):
    R, K = x2.shape
    N = w1.shape[1]
    limit = _vmem_limit_bytes([((tm, K), jnp.float32),
                               ((K, N), jnp.bfloat16),
                               ((tm, N), jnp.bfloat16)])
    return pl.pallas_call(
        _stage1_kernel,
        out_shape=jax.ShapeDtypeStruct((R, N), jnp.bfloat16),
        grid=(R // tm,),
        in_specs=[
            pl.BlockSpec((tm, K), lambda i: (i, 0)),
            pl.BlockSpec((K, N), lambda i: (0, 0)),
        ],
        out_specs=pl.BlockSpec((tm, N), lambda i: (i, 0)),
        compiler_params=pltpu.CompilerParams(
            dimension_semantics=("parallel",),
            vmem_limit_bytes=limit),
    )(x2, w1)


def _run_stage2(h2, w2, bias_tile, tm):
    R, K = h2.shape
    N = w2.shape[1]
    limit = _vmem_limit_bytes([((tm, K), jnp.bfloat16),
                               ((K, N), jnp.bfloat16),
                               ((tm, N), jnp.float32),
                               ((tm, N), jnp.float32)])
    return pl.pallas_call(
        _stage2_bias_kernel,
        out_shape=jax.ShapeDtypeStruct((R, N), jnp.float32),
        grid=(R // tm,),
        in_specs=[
            pl.BlockSpec((tm, K), lambda i: (i, 0)),
            pl.BlockSpec((K, N), lambda i: (0, 0)),
            pl.BlockSpec((tm, N), lambda i: (0, 0)),
        ],
        out_specs=pl.BlockSpec((tm, N), lambda i: (i, 0)),
        compiler_params=pltpu.CompilerParams(
            dimension_semantics=("parallel",),
            vmem_limit_bytes=limit),
    )(h2, w2, bias_tile)


# ---------------------------------------------------------------------------
# TTLayer equivalent
# ---------------------------------------------------------------------------
class TTLayerPallas:
    def __init__(self, tt_input_shape, tt_output_shape, tt_ranks, seed=0, split=3):
        np.random.seed(seed)  # deterministic synthetic init
        cores_arr, cores_shape, cores_indexes = _generate_orthogonal_tt_cores(
            tt_input_shape, tt_output_shape, tt_ranks)
        # Match the PyTorch module: iterate cores in reversed order.
        cores_shape = [(int(a), int(b)) for (a, b) in reversed(cores_shape)]
        cores_indexes = [(int(s), int(e)) for (s, e) in reversed(cores_indexes)]
        step_mats = [cores_arr[s:e].reshape(k, n)
                     for (k, n), (s, e) in zip(cores_shape, cores_indexes)]

        self.in_features = int(np.prod(tt_input_shape))     # 3072
        self.out_features = int(np.prod(tt_output_shape))   # 15625

        # --- Merge 6 tiny TT steps into 2 MXU-friendly matmuls (exact). ---
        w1 = _merge_steps(step_mats[:split])     # (48, 375)
        w2 = _merge_steps(step_mats[split:])     # (192, 125)
        self.K1, self.N1 = w1.shape
        self.K2, self.N2 = w2.shape
        self.M1 = self.in_features // self.K1                # 64 rows / batch elem
        self.M2 = (self.M1 * self.N1) // self.K2             # 125 rows / batch elem
        assert self.M1 * self.K1 == self.in_features
        assert self.M2 * self.K2 == self.M1 * self.N1
        assert self.M2 * self.N2 == self.out_features

        # Init-time equivalence check (float64): merged 2-stage == original 6-step chain.
        probe = np.random.RandomState(123).normal(size=(self.in_features,))
        ref = probe.copy()
        for m in step_mats:
            ref = (ref.reshape(-1, m.shape[0]) @ m).reshape(-1)
        merged = (probe.reshape(self.M1, self.K1) @ w1).reshape(self.M2, self.K2) @ w2
        np.testing.assert_allclose(merged.reshape(-1), ref, rtol=1e-9, atol=1e-12)

        # Pre-laid-out parameters.  Weights in bf16 (MXU inputs); bias in f32.
        self.w1 = jnp.asarray(w1, dtype=jnp.bfloat16)
        self.w2 = jnp.asarray(w2, dtype=jnp.bfloat16)
        bias = np.zeros((self.out_features,), dtype=np.float32)   # module inits bias to 0
        self.bias = jnp.asarray(bias)
        self.bias2d = jnp.asarray(bias.reshape(self.M2, self.N2))  # (125, 125) f32

        # Kept only for the pure-JAX reference of the original (unmerged) module.
        self.cores_arr = jnp.asarray(cores_arr, dtype=jnp.float32)
        self.cores_shape = cores_shape
        self.cores_indexes = cores_indexes

    def __call__(self, x):
        # x: (batch, prod(tt_input_shape)) f32
        B = x.shape[0]
        assert x.shape[1] == self.in_features
        x = x.astype(jnp.float32)

        # Pad the batch to a multiple of 8 so the folded row counts divide the
        # tile candidates (B*64 -> mult. of 512, B*125 -> mult. of 1000); the
        # pad rows are sliced off at the end — no tail rows are ever dropped.
        Bp = ((B + 7) // 8) * 8
        if Bp != B:
            x = jnp.pad(x, ((0, Bp - B), (0, 0)))

        R1 = Bp * self.M1                 # rows of the stage-1 matmul
        R2 = Bp * self.M2                 # rows of the stage-2 matmul
        tm1 = _pick_row_tile(R1, (4096, 2048, 1024, 512))
        tm2 = _pick_row_tile(R2, (4000, 2000, 1000))   # multiples of 125 & 8

        x2 = x.reshape(R1, self.K1)                        # (Bp*64, 48)
        h = _run_stage1(x2, self.w1, tm1)                  # (Bp*64, 375) bf16
        h2 = h.reshape(R2, self.K2)                        # (Bp*125, 192) bf16
        bias_tile = jnp.tile(self.bias2d, (tm2 // self.M2, 1))   # (tm2, 125) f32
        y = _run_stage2(h2, self.w2, bias_tile, tm2)       # (Bp*125, 125) f32
        y = y.reshape(Bp, self.out_features)
        if Bp != B:
            y = y[:B]
        return y

    # Pure-JAX reference: the ORIGINAL unmerged 6-step chain (module semantics).
    def reference(self, x):
        B = x.shape[0]
        for (K, N), (s, e) in zip(self.cores_shape, self.cores_indexes):
            x = x.reshape(B, -1, K)
            w = self.cores_arr[s:e].reshape(K, N)
            x = jnp.einsum("bmk,kn->bmn", x, w,
                           precision=jax.lax.Precision.HIGHEST)
        return x.reshape(B, -1) + self.bias


if __name__ == "__main__":
    layer = TTLayerPallas(TT_INPUT_SHAPE, TT_OUTPUT_SHAPE, TT_RANKS, seed=0)

    batch = 2
    in_features = int(np.prod(TT_INPUT_SHAPE))    # 3072
    out_features = int(np.prod(TT_OUTPUT_SHAPE))  # 15625

    key = jax.random.PRNGKey(0)
    x = jax.random.normal(key, (batch, in_features), dtype=jnp.float32)

    fwd = jax.jit(lambda xx: layer(xx))
    out = jax.block_until_ready(fwd(x))

    assert out.shape == (batch, out_features), out.shape

    ref = jax.block_until_ready(layer.reference(x))
    np.testing.assert_allclose(np.asarray(out), np.asarray(ref), rtol=2e-2, atol=1e-6)

    print("KERNEL_OK")
</pallas_src>

<mosaic_0001>
module attributes {stable_mosaic.version = 11 : i64} {
  func.func @_stage1_kernel(%arg0: i32, %arg1: memref<512x48xf32, #tpu.memory_space<vmem>>, %arg2: memref<48x375xbf16, #tpu.memory_space<vmem>>, %arg3: memref<512x375xbf16, #tpu.memory_space<vmem>>) attributes {dimension_semantics = [#tpu.dimension_semantics<parallel>], iteration_bounds = array<i64: 1>, scalar_prefetch = 0 : i64, scratch_operands = 0 : i64, tpu.core_type = #tpu.core_type<tc>, window_params = [{transform_indices = @transform_0, window_bounds = array<i64: 512, 48>}, {pipeline_mode = #tpu.pipeline_mode<synchronous>, transform_indices = @transform_1, window_bounds = array<i64: 48, 375>}, {transform_indices = @transform_2, window_bounds = array<i64: 512, 375>}]} {
    %c0 = arith.constant 0 : index
    %c0_0 = arith.constant 0 : index
    %0 = vector.load %arg1[%c0, %c0_0] : memref<512x48xf32, #tpu.memory_space<vmem>>, vector<512x48xf32>
    %1 = arith.truncf %0 : vector<512x48xf32> to vector<512x48xbf16>
    %c0_1 = arith.constant 0 : index
    %c0_2 = arith.constant 0 : index
    %2 = vector.load %arg2[%c0_1, %c0_2] : memref<48x375xbf16, #tpu.memory_space<vmem>>, vector<48x375xbf16>
    %cst = arith.constant dense<0.000000e+00> : vector<512x375xf32>
    %3 = tpu.matmul %1, %2, %cst {dimension_numbers = #tpu.dot_dimension_numbers<[1], [0], [0], [1], [0, 0, 1, 1], [], []>} : vector<512x48xbf16>, vector<48x375xbf16>, vector<512x375xf32> -> vector<512x375xf32>
    %4 = arith.truncf %3 : vector<512x375xf32> to vector<512x375xbf16>
    %c0_3 = arith.constant 0 : index
    %c0_4 = arith.constant 0 : index
    %5 = vector.load %arg3[%c0_3, %c0_4] : memref<512x375xbf16, #tpu.memory_space<vmem>>, vector<512x375xbf16>
    tpu.vector_store %arg3[%c0_3, %c0_4], %4 {strides = array<i32>} : memref<512x375xbf16, #tpu.memory_space<vmem>>, vector<512x375xbf16>,
    return
  }
  func.func @transform_0(%arg0: i32) -> (i32, i32) {
    %c0_i32 = arith.constant 0 : i32
    %c0_i32_0 = arith.constant 0 : i32
    return %arg0, %c0_i32 : i32, i32
  }
  func.func @transform_1(%arg0: i32) -> (i32, i32) {
    %c0_i32 = arith.constant 0 : i32
    %c0_i32_0 = arith.constant 0 : i32
    %c0_i32_1 = arith.constant 0 : i32
    return %c0_i32, %c0_i32_0 : i32, i32
  }
  func.func @transform_2(%arg0: i32) -> (i32, i32) {
    %c0_i32 = arith.constant 0 : i32
    %c0_i32_0 = arith.constant 0 : i32
    return %arg0, %c0_i32 : i32, i32
  }
}

module attributes {stable_mosaic.version = 11 : i64} {
  func.func @_stage2_bias_kernel(%arg0: i32, %arg1: memref<1000x192xbf16, #tpu.memory_space<vmem>>, %arg2: memref<192x125xbf16, #tpu.memory_space<vmem>>, %arg3: memref<1000x125xf32, #tpu.memory_space<vmem>>, %arg4: memref<1000x125xf32, #tpu.memory_space<vmem>>) attributes {dimension_semantics = [#tpu.dimension_semantics<parallel>], iteration_bounds = array<i64: 1>, scalar_prefetch = 0 : i64, scratch_operands = 0 : i64, tpu.core_type = #tpu.core_type<tc>, window_params = [{transform_indices = @transform_0, window_bounds = array<i64: 1000, 192>}, {pipeline_mode = #tpu.pipeline_mode<synchronous>, transform_indices = @transform_1, window_bounds = array<i64: 192, 125>}, {pipeline_mode = #tpu.pipeline_mode<synchronous>, transform_indices = @transform_2, window_bounds = array<i64: 1000, 125>}, {transform_indices = @transform_3, window_bounds = array<i64: 1000, 125>}]} {
    %c0 = arith.constant 0 : index
    %c0_0 = arith.constant 0 : index
    %0 = vector.load %arg1[%c0, %c0_0] : memref<1000x192xbf16, #tpu.memory_space<vmem>>, vector<1000x192xbf16>
    %c0_1 = arith.constant 0 : index
    %c0_2 = arith.constant 0 : index
    %1 = vector.load %arg2[%c0_1, %c0_2] : memref<192x125xbf16, #tpu.memory_space<vmem>>, vector<192x125xbf16>
    %cst = arith.constant dense<0.000000e+00> : vector<1000x125xf32>
    %2 = tpu.matmul %0, %1, %cst {dimension_numbers = #tpu.dot_dimension_numbers<[1], [0], [0], [1], [0, 0, 1, 1], [], []>} : vector<1000x192xbf16>, vector<192x125xbf16>, vector<1000x125xf32> -> vector<1000x125xf32>
    %c0_3 = arith.constant 0 : index
    %c0_4 = arith.constant 0 : index
    %3 = vector.load %arg3[%c0_3, %c0_4] : memref<1000x125xf32, #tpu.memory_space<vmem>>, vector<1000x125xf32>
    %4 = arith.addf %2, %3 : vector<1000x125xf32>
    %c0_5 = arith.constant 0 : index
    %c0_6 = arith.constant 0 : index
    %5 = vector.load %arg4[%c0_5, %c0_6] : memref<1000x125xf32, #tpu.memory_space<vmem>>, vector<1000x125xf32>
    tpu.vector_store %arg4[%c0_5, %c0_6], %4 {strides = array<i32>} : memref<1000x125xf32, #tpu.memory_space<vmem>>, vector<1000x125xf32>,
    return
  }
  func.func @transform_0(%arg0: i32) -> (i32, i32) {
    %c0_i32 = arith.constant 0 : i32
    %c0_i32_0 = arith.constant 0 : i32
    return %arg0, %c0_i32 : i32, i32
  }
  func.func @transform_1(%arg0: i32) -> (i32, i32) {
    %c0_i32 = arith.constant 0 : i32
    %c0_i32_0 = arith.constant 0 : i32
    %c0_i32_1 = arith.constant 0 : i32
    return %c0_i32, %c0_i32_0 : i32, i32
  }
  func.func @transform_2(%arg0: i32) -> (i32, i32) {
    %c0_i32 = arith.constant 0 : i32
    %c0_i32_0 = arith.constant 0 : i32
    %c0_i32_1 = arith.constant 0 : i32
    return %c0_i32, %c0_i32_0 : i32, i32
  }
  func.func @transform_3(%arg0: i32) -> (i32, i32) {
    %c0_i32 = arith.constant 0 : i32
    %c0_i32_0 = arith.constant 0 : i32
    return %arg0, %c0_i32 : i32, i32
  }
}

</mosaic_0001>

<llo_original>
// kernel: tile.1
$region0: #{tile.1}
  #allocation0 [shape = 's32[1]{0}', space=sflag, size = 0x4, scoped, tag = 'scoped memory for tile.1']
  %s0 = inlined_call_operand.<no memory space> [shape: f32[], index: 0, kind: input, shape index: {}]
  %s1 = inlined_call_operand.vmem [shape: f32[1000,125], index: 1, kind: output, shape index: {}]
  %v2 = vstv %s0
  %3 = vst [vmem:[%s1] sm:$0xff] %v2
  %s4 = scalar_lea.vmem %s1, 8
  %5 = vst [vmem:[%s4] sm:$0xff] %v2
  %s6 = scalar_lea.vmem %s1, 16
  %7 = vst [vmem:[%s6] sm:$0xff] %v2
  %s8 = scalar_lea.vmem %s1, 24
  %9 = vst [vmem:[%s8] sm:$0xff] %v2
  %s10 = scalar_lea.vmem %s1, 32
  %11 = vst [vmem:[%s10] sm:$0xff] %v2
  %s12 = scalar_lea.vmem %s1, 40
  %13 = vst [vmem:[%s12] sm:$0xff] %v2
  %s14 = scalar_lea.vmem %s1, 48
  %15 = vst [vmem:[%s14] sm:$0xff] %v2
  %s16 = scalar_lea.vmem %s1, 56
  %17 = vst [vmem:[%s16] sm:$0xff] %v2
  %s18 = scalar_lea.vmem %s1, 64
  %19 = vst [vmem:[%s18] sm:$0xff] %v2
  %s20 = scalar_lea.vmem %s1, 72
  %21 = vst [vmem:[%s20] sm:$0xff] %v2
  %s22 = scalar_lea.vmem %s1, 80
  %23 = vst [vmem:[%s22] sm:$0xff] %v2
  %s24 = scalar_lea.vmem %s1, 88
  %25 = vst [vmem:[%s24] sm:$0xff] %v2
  %s26 = scalar_lea.vmem %s1, 96
  %27 = vst [vmem:[%s26] sm:$0xff] %v2
  %s28 = scalar_lea.vmem %s1, 104
  %29 = vst [vmem:[%s28] sm:$0xff] %v2
  %s30 = scalar_lea.vmem %s1, 112
  %31 = vst [vmem:[%s30] sm:$0xff] %v2
  %s32 = scalar_lea.vmem %s1, 120
  %33 = vst [vmem:[%s32] sm:$0xff] %v2
  %s34 = scalar_lea.vmem %s1, 128
  %35 = vst [vmem:[%s34] sm:$0xff] %v2
  %s36 = scalar_lea.vmem %s1, 136
  %37 = vst [vmem:[%s36] sm:$0xff] %v2
  %s38 = scalar_lea.vmem %s1, 144
  %39 = vst [vmem:[%s38] sm:$0xff] %v2
  %s40 = scalar_lea.vmem %s1, 152
  %41 = vst [vmem:[%s40] sm:$0xff] %v2
  %s42 = scalar_lea.vmem %s1, 160
  %43 = vst [vmem:[%s42] sm:$0xff] %v2
  %s44 = scalar_lea.vmem %s1, 168
  %45 = vst [vmem:[%s44] sm:$0xff] %v2
  %s46 = scalar_lea.vmem %s1, 176
  %47 = vst [vmem:[%s46] sm:$0xff] %v2
  %s48 = scalar_lea.vmem %s1, 184
  %49 = vst [vmem:[%s48] sm:$0xff] %v2
  %s50 = scalar_lea.vmem %s1, 192
  %51 = vst [vmem:[%s50] sm:$0xff] %v2
  %s52 = scalar_lea.vmem %s1, 200
  %53 = vst [vmem:[%s52] sm:$0xff] %v2
  %s54 = scalar_lea.vmem %s1, 208
  %55 = vst [vmem:[%s54] sm:$0xff] %v2
  %s56 = scalar_lea.vmem %s1, 216
  %57 = vst [vmem:[%s56] sm:$0xff] %v2
  %s58 = scalar_lea.vmem %s1, 224
  %59 = vst [vmem:[%s58] sm:$0xff] %v2
  %s60 = scalar_lea.vmem %s1, 232
  %61 = vst [vmem:[%s60] sm:$0xff] %v2
  %s62 = scalar_lea.vmem %s1, 240
  %63 = vst [vmem:[%s62] sm:$0xff] %v2
  %s64 = scalar_lea.vmem %s1, 248
  %65 = vst [vmem:[%s64] sm:$0xff] %v2
  %s66 = scalar_lea.vmem %s1, 256
  %67 = vst [vmem:[%s66] sm:$0xff] %v2
  %s68 = scalar_lea.vmem %s1, 264
  %69 = vst [vmem:[%s68] sm:$0xff] %v2
  %s70 = scalar_lea.vmem %s1, 272
  %71 = vst [vmem:[%s70] sm:$0xff] %v2
  %s72 = scalar_lea.vmem %s1, 280
  %73 = vst [vmem:[%s72] sm:$0xff] %v2
  %s74 = scalar_lea.vmem %s1, 288
  %75 = vst [vmem:[%s74] sm:$0xff] %v2
  %s76 = scalar_lea.vmem %s1, 296
  %77 = vst [vmem:[%s76] sm:$0xff] %v2
  %s78 = scalar_lea.vmem %s1, 304
  %79 = vst [vmem:[%s78] sm:$0xff] %v2
  %s80 = scalar_lea.vmem %s1, 312
  %81 = vst [vmem:[%s80] sm:$0xff] %v2
  %s82 = scalar_lea.vmem %s1, 320
  %83 = vst [vmem:[%s82] sm:$0xff] %v2
  %s84 = scalar_lea.vmem %s1, 328
  %85 = vst [vmem:[%s84] sm:$0xff] %v2
  %s86 = scalar_lea.vmem %s1, 336
  %87 = vst [vmem:[%s86] sm:$0xff] %v2
  %s88 = scalar_lea.vmem %s1, 344
  %89 = vst [vmem:[%s88] sm:$0xff] %v2
  %s90 = scalar_lea.vmem %s1, 352
  %91 = vst [vmem:[%s90] sm:$0xff] %v2
  %s92 = scalar_lea.vmem %s1, 360
  %93 = vst [vmem:[%s92] sm:$0xff] %v2
  %s94 = scalar_lea.vmem %s1, 368
  %95 = vst [vmem:[%s94] sm:$0xff] %v2
  %s96 = scalar_lea.vmem %s1, 376
  %97 = vst [vmem:[%s96] sm:$0xff] %v2
  %s98 = scalar_lea.vmem %s1, 384
  %99 = vst [vmem:[%s98] sm:$0xff] %v2
  %s100 = scalar_lea.vmem %s1, 392
  %101 = vst [vmem:[%s100] sm:$0xff] %v2
  %s102 = scalar_lea.vmem %s1, 400
  %103 = vst [vmem:[%s102] sm:$0xff] %v2
  %s104 = scalar_lea.vmem %s1, 408
  %105 = vst [vmem:[%s104] sm:$0xff] %v2
  %s106 = scalar_lea.vmem %s1, 416
  %107 = vst [vmem:[%s106] sm:$0xff] %v2
  %s108 = scalar_lea.vmem %s1, 424
  %109 = vst [vmem:[%s108] sm:$0xff] %v2
  %s110 = scalar_lea.vmem %s1, 432
  %111 = vst [vmem:[%s110] sm:$0xff] %v2
  %s112 = scalar_lea.vmem %s1, 440
  %113 = vst [vmem:[%s112] sm:$0xff] %v2
  %s114 = scalar_lea.vmem %s1, 448
  %115 = vst [vmem:[%s114] sm:$0xff] %v2
  %s116 = scalar_lea.vmem %s1, 456
  %117 = vst [vmem:[%s116] sm:$0xff] %v2
  %s118 = scalar_lea.vmem %s1, 464
  %119 = vst [vmem:[%s118] sm:$0xff] %v2
  %s120 = scalar_lea.vmem %s1, 472
  %121 = vst [vmem:[%s120] sm:$0xff] %v2
  %s122 = scalar_lea.vmem %s1, 480
  %123 = vst [vmem:[%s122] sm:$0xff] %v2
  %s124 = scalar_lea.vmem %s1, 488
  %125 = vst [vmem:[%s124] sm:$0xff] %v2
  %s126 = scalar_lea.vmem %s1, 496
  %127 = vst [vmem:[%s126] sm:$0xff] %v2
  %s128 = scalar_lea.vmem %s1, 504
  %129 = vst [vmem:[%s128] sm:$0xff] %v2
  %s130 = scalar_lea.vmem %s1, 512
  %131 = vst [vmem:[%s130] sm:$0xff] %v2
  %s132 = scalar_lea.vmem %s1, 520
  %133 = vst [vmem:[%s132] sm:$0xff] %v2
  %s134 = scalar_lea.vmem %s1, 528
  %135 = vst [vmem:[%s134] sm:$0xff] %v2
  %s136 = scalar_lea.vmem %s1, 536
  %137 = vst [vmem:[%s136] sm:$0xff] %v2
  %s138 = scalar_lea.vmem %s1, 544
  %139 = vst [vmem:[%s138] sm:$0xff] %v2
  %s140 = scalar_lea.vmem %s1, 552
  %141 = vst [vmem:[%s140] sm:$0xff] %v2
  %s142 = scalar_lea.vmem %s1, 560
  %143 = vst [vmem:[%s142] sm:$0xff] %v2
  %s144 = scalar_lea.vmem %s1, 568
  %145 = vst [vmem:[%s144] sm:$0xff] %v2
  %s146 = scalar_lea.vmem %s1, 576
  %147 = vst [vmem:[%s146] sm:$0xff] %v2
  %s148 = scalar_lea.vmem %s1, 584
  %149 = vst [vmem:[%s148] sm:$0xff] %v2
  %s150 = scalar_lea.vmem %s1, 592
  %151 = vst [vmem:[%s150] sm:$0xff] %v2
  %s152 = scalar_lea.vmem %s1, 600
  %153 = vst [vmem:[%s152] sm:$0xff] %v2
  %s154 = scalar_lea.vmem %s1, 608
  %155 = vst [vmem:[%s154] sm:$0xff] %v2
  %s156 = scalar_lea.vmem %s1, 616
  %157 = vst [vmem:[%s156] sm:$0xff] %v2
  %s158 = scalar_lea.vmem %s1, 624
  %159 = vst [vmem:[%s158] sm:$0xff] %v2
  %s160 = scalar_lea.vmem %s1, 632
  %161 = vst [vmem:[%s160] sm:$0xff] %v2
  %s162 = scalar_lea.vmem %s1, 640
  %163 = vst [vmem:[%s162] sm:$0xff] %v2
  %s164 = scalar_lea.vmem %s1, 648
  %165 = vst [vmem:[%s164] sm:$0xff] %v2
  %s166 = scalar_lea.vmem %s1, 656
  %167 = vst [vmem:[%s166] sm:$0xff] %v2
  %s168 = scalar_lea.vmem %s1, 664
  %169 = vst [vmem:[%s168] sm:$0xff] %v2
  %s170 = scalar_lea.vmem %s1, 672
  %171 = vst [vmem:[%s170] sm:$0xff] %v2
  %s172 = scalar_lea.vmem %s1, 680
  %173 = vst [vmem:[%s172] sm:$0xff] %v2
  %s174 = scalar_lea.vmem %s1, 688
  %175 = vst [vmem:[%s174] sm:$0xff] %v2
  %s176 = scalar_lea.vmem %s1, 696
  %177 = vst [vmem:[%s176] sm:$0xff] %v2
  %s178 = scalar_lea.vmem %s1, 704
  %179 = vst [vmem:[%s178] sm:$0xff] %v2
  %s180 = scalar_lea.vmem %s1, 712
  %181 = vst [vmem:[%s180] sm:$0xff] %v2
  %s182 = scalar_lea.vmem %s1, 720
  %183 = vst [vmem:[%s182] sm:$0xff] %v2
  %s184 = scalar_lea.vmem %s1, 728
  %185 = vst [vmem:[%s184] sm:$0xff] %v2
  %s186 = scalar_lea.vmem %s1, 736
  %187 = vst [vmem:[%s186] sm:$0xff] %v2
  %s188 = scalar_lea.vmem %s1, 744
  %189 = vst [vmem:[%s188] sm:$0xff] %v2
  %s190 = scalar_lea.vmem %s1, 752
  %191 = vst [vmem:[%s190] sm:$0xff] %v2
  %s192 = scalar_lea.vmem %s1, 760
  %193 = vst [vmem:[%s192] sm:$0xff] %v2
  %s194 = scalar_lea.vmem %s1, 768
  %195 = vst [vmem:[%s194] sm:$0xff] %v2
  %s196 = scalar_lea.vmem %s1, 776
  %197 = vst [vmem:[%s196] sm:$0xff] %v2
  %s198 = scalar_lea.vmem %s1, 784
  %199 = vst [vmem:[%s198] sm:$0xff] %v2
  %s200 = scalar_lea.vmem %s1, 792
  %201 = vst [vmem:[%s200] sm:$0xff] %v2
  %s202 = scalar_lea.vmem %s1, 800
  %203 = vst [vmem:[%s202] sm:$0xff] %v2
  %s204 = scalar_lea.vmem %s1, 808
  %205 = vst [vmem:[%s204] sm:$0xff] %v2
  %s206 = scalar_lea.vmem %s1, 816
  %207 = vst [vmem:[%s206] sm:$0xff] %v2
  %s208 = scalar_lea.vmem %s1, 824
  %209 = vst [vmem:[%s208] sm:$0xff] %v2
  %s210 = scalar_lea.vmem %s1, 832
  %211 = vst [vmem:[%s210] sm:$0xff] %v2
  %s212 = scalar_lea.vmem %s1, 840
  %213 = vst [vmem:[%s212] sm:$0xff] %v2
  %s214 = scalar_lea.vmem %s1, 848
  %215 = vst [vmem:[%s214] sm:$0xff] %v2
  %s216 = scalar_lea.vmem %s1, 856
  %217 = vst [vmem:[%s216] sm:$0xff] %v2
  %s218 = scalar_lea.vmem %s1, 864
  %219 = vst [vmem:[%s218] sm:$0xff] %v2
  %s220 = scalar_lea.vmem %s1, 872
  %221 = vst [vmem:[%s220] sm:$0xff] %v2
  %s222 = scalar_lea.vmem %s1, 880
  %223 = vst [vmem:[%s222] sm:$0xff] %v2
  %s224 = scalar_lea.vmem %s1, 888
  %225 = vst [vmem:[%s224] sm:$0xff] %v2
  %s226 = scalar_lea.vmem %s1, 896
  %227 = vst [vmem:[%s226] sm:$0xff] %v2
  %s228 = scalar_lea.vmem %s1, 904
  %229 = vst [vmem:[%s228] sm:$0xff] %v2
  %s230 = scalar_lea.vmem %s1, 912
  %231 = vst [vmem:[%s230] sm:$0xff] %v2
  %s232 = scalar_lea.vmem %s1, 920
  %233 = vst [vmem:[%s232] sm:$0xff] %v2
  %s234 = scalar_lea.vmem %s1, 928
  %235 = vst [vmem:[%s234] sm:$0xff] %v2
  %s236 = scalar_lea.vmem %s1, 936
  %237 = vst [vmem:[%s236] sm:$0xff] %v2
  %s238 = scalar_lea.vmem %s1, 944
  %239 = vst [vmem:[%s238] sm:$0xff] %v2
  %s240 = scalar_lea.vmem %s1, 952
  %241 = vst [vmem:[%s240] sm:$0xff] %v2
  %s242 = scalar_lea.vmem %s1, 960
  %243 = vst [vmem:[%s242] sm:$0xff] %v2
  %s244 = scalar_lea.vmem %s1, 968
  %245 = vst [vmem:[%s244] sm:$0xff] %v2
  %s246 = scalar_lea.vmem %s1, 976
  %247 = vst [vmem:[%s246] sm:$0xff] %v2
  %s248 = scalar_lea.vmem %s1, 984
  %249 = vst [vmem:[%s248] sm:$0xff] %v2
  %s250 = scalar_lea.vmem %s1, 992
  %251 = vst [vmem:[%s250] sm:$0xff] %v2

// kernel: _lambda_.2
$region0: #{_lambda_.2}
  #allocation0 [shape = 'u32[]', space=smem, size = 0x4, offset = 0x4, fixed_abs, tag = 'smem constant byte address 0x4 - core index']
  #allocation1 [shape = 'u32[72,128]{1,0:T(1,128)}', space=vmem, size = 0x9000, scoped, tag = 'internal scratch']
  %s0 = inlined_call_operand.vmem [shape: f32[512,48], index: 0, kind: input, shape index: {}]
  %s1 = inlined_call_operand.vmem [shape: bf16[48,375], index: 1, kind: input, shape index: {}]
  %s2 = inlined_call_operand.vmem [shape: bf16[512,375], index: 2, kind: output, shape index: {}]
  %s3 = sld [smem:[#allocation0]]
  $region18: #{_lambda_.2} parent=0
    _
  %s5 = ssub.s32 1, %s3
  %s6 = scalar_select 0, %s5, %s3
  // Predicated region
  $region2: #{_lambda_.2} parent=0 // pred_check
    _
  $region3: #{_lambda_.2} parent=0 // pred_check_branch
    %8 = sbr.rel (0) target = $region5
  $region4: #{_lambda_.2} parent=0 // pred_region
    _
  $region5: #{_lambda_.2} parent=0 // pred_fallthru
    _
  // Predicated region
  $region6: #{_lambda_.2} parent=0 // pred_check
    _
  $region7: #{_lambda_.2} parent=0 // pred_check_branch
    %10 = sbr.rel (0) target = $region9
  $region8: #{_lambda_.2} parent=0 // pred_region
    _
  $region9: #{_lambda_.2} parent=0 // pred_fallthru
    _
  %v12 = vld [vmem:[%s0] sm:$0xff]
  %v13 = vld [vmem:[%s0 + $0x8] sm:$0xff]
  %v14 = vld [vmem:[%s0 + $0x10] sm:$0xff]
  %v15 = vld [vmem:[%s0 + $0x18] sm:$0xff]
  %v16 = vld [vmem:[%s0 + $0x20] sm:$0xff]
  %v17 = vld [vmem:[%s0 + $0x28] sm:$0xff]
  %v18 = vld [vmem:[%s0 + $0x30] sm:$0xff]
  %v19 = vld [vmem:[%s0 + $0x38] sm:$0xff]
  %v20 = vld [vmem:[%s0 + $0x40] sm:$0xff]
  %v21 = vld [vmem:[%s0 + $0x48] sm:$0xff]
  %v22 = vld [vmem:[%s0 + $0x50] sm:$0xff]
  %v23 = vld [vmem:[%s0 + $0x58] sm:$0xff]
  %v24 = vld [vmem:[%s0 + $0x60] sm:$0xff]
  %v25 = vld [vmem:[%s0 + $0x68] sm:$0xff]
  %v26 = vld [vmem:[%s0 + $0x70] sm:$0xff]
  %v27 = vld [vmem:[%s0 + $0x78] sm:$0xff]
  %v28 = vld [vmem:[%s0 + $0x80] sm:$0xff]
  %v29 = vld [vmem:[%s0 + $0x88] sm:$0xff]
  %v30 = vld [vmem:[%s0 + $0x90] sm:$0xff]
  %v31 = vld [vmem:[%s0 + $0x98] sm:$0xff]
  %v32 = vld [vmem:[%s0 + $0xa0] sm:$0xff]
  %v33 = vld [vmem:[%s0 + $0xa8] sm:$0xff]
  %v34 = vld [vmem:[%s0 + $0xb0] sm:$0xff]
  %v35 = vld [vmem:[%s0 + $0xb8] sm:$0xff]
  %v36 = vld [vmem:[%s0 + $0xc0] sm:$0xff]
  %v37 = vld [vmem:[%s0 + $0xc8] sm:$0xff]
  %v38 = vld [vmem:[%s0 + $0xd0] sm:$0xff]
  %v39 = vld [vmem:[%s0 + $0xd8] sm:$0xff]
  %v40 = vld [vmem:[%s0 + $0xe0] sm:$0xff]
  %v41 = vld [vmem:[%s0 + $0xe8] sm:$0xff]
  %v42 = vld [vmem:[%s0 + $0xf0] sm:$0xff]
  %v43 = vld [vmem:[%s0 + $0xf8] sm:$0xff]
  %v44 = vld [vmem:[%s0 + $0x100] sm:$0xff]
  %v45 = vld [vmem:[%s0 + $0x108] sm:$0xff]
  %v46 = vld [vmem:[%s0 + $0x110] sm:$0xff]
  %v47 = vld [vmem:[%s0 + $0x118] sm:$0xff]
  %v48 = vld [vmem:[%s0 + $0x120] sm:$0xff]
  %v49 = vld [vmem:[%s0 + $0x128] sm:$0xff]
  %v50 = vld [vmem:[%s0 + $0x130] sm:$0xff]
  %v51 = vld [vmem:[%s0 + $0x138] sm:$0xff]
  %v52 = vld [vmem:[%s0 + $0x140] sm:$0xff]
  %v53 = vld [vmem:[%s0 + $0x148] sm:$0xff]
  %v54 = vld [vmem:[%s0 + $0x150] sm:$0xff]
  %v55 = vld [vmem:[%s0 + $0x158] sm:$0xff]
  %v56 = vld [vmem:[%s0 + $0x160] sm:$0xff]
  %v57 = vld [vmem:[%s0 + $0x168] sm:$0xff]
  %v58 = vld [vmem:[%s0 + $0x170] sm:$0xff]
  %v59 = vld [vmem:[%s0 + $0x178] sm:$0xff]
  %v60 = vld [vmem:[%s0 + $0x180] sm:$0xff]
  %v61 = vld [vmem:[%s0 + $0x188] sm:$0xff]
  %v62 = vld [vmem:[%s0 + $0x190] sm:$0xff]
  %v63 = vld [vmem:[%s0 + $0x198] sm:$0xff]
  %v64 = vld [vmem:[%s0 + $0x1a0] sm:$0xff]
  %v65 = vld [vmem:[%s0 + $0x1a8] sm:$0xff]
  %v66 = vld [vmem:[%s0 + $0x1b0] sm:$0xff]
  %v67 = vld [vmem:[%s0 + $0x1b8] sm:$0xff]
  %v68 = vld [vmem:[%s0 + $0x1c0] sm:$0xff]
  %v69 = vld [vmem:[%s0 + $0x1c8] sm:$0xff]
  %v70 = vld [vmem:[%s0 + $0x1d0] sm:$0xff]
  %v71 = vld [vmem:[%s0 + $0x1d8] sm:$0xff]
  %v72 = vld [vmem:[%s0 + $0x1e0] sm:$0xff]
  %v73 = vld [vmem:[%s0 + $0x1e8] sm:$0xff]
  %v74 = vld [vmem:[%s0 + $0x1f0] sm:$0xff]
  %v75 = vld [vmem:[%s0 + $0x1f8] sm:$0xff]
  %v76 = vpack.c.bf16 %v13, %v12
  %v77 = vpack.c.bf16 %v15, %v14
  %v78 = vpack.c.bf16 %v17, %v16
  %v79 = vpack.c.bf16 %v19, %v18
  %v80 = vpack.c.bf16 %v21, %v20
  %v81 = vpack.c.bf16 %v23, %v22
  %v82 = vpack.c.bf16 %v25, %v24
  %v83 = vpack.c.bf16 %v27, %v26
  %v84 = vpack.c.bf16 %v29, %v28
  %v85 = vpack.c.bf16 %v31, %v30
  %v86 = vpack.c.bf16 %v33, %v32
  %v87 = vpack.c.bf16 %v35, %v34
  %v88 = vpack.c.bf16 %v37, %v36
  %v89 = vpack.c.bf16 %v39, %v38
  %v90 = vpack.c.bf16 %v41, %v40
  %v91 = vpack.c.bf16 %v43, %v42
  %v92 = vpack.c.bf16 %v45, %v44
  %v93 = vpack.c.bf16 %v47, %v46
  %v94 = vpack.c.bf16 %v49, %v48
  %v95 = vpack.c.bf16 %v51, %v50
  %v96 = vpack.c.bf16 %v53, %v52
  %v97 = vpack.c.bf16 %v55, %v54
  %v98 = vpack.c.bf16 %v57, %v56
  %v99 = vpack.c.bf16 %v59, %v58
  %v100 = vpack.c.bf16 %v61, %v60
  %v101 = vpack.c.bf16 %v63, %v62
  %v102 = vpack.c.bf16 %v65, %v64
  %v103 = vpack.c.bf16 %v67, %v66
  %v104 = vpack.c.bf16 %v69, %v68
  %v105 = vpack.c.bf16 %v71, %v70
  %v106 = vpack.c.bf16 %v73, %v72
  %v107 = vpack.c.bf16 %v75, %v74
  %v108 = vld [vmem:[%s1] sm:$0xff]
  %v109 = vld [vmem:[%s1 + $0x8] sm:$0xf]
  %v110 = vld [vmem:[%s1 + $0xc] sm:$0xff]
  %v111 = vld [vmem:[%s1 + $0x14] sm:$0xf]
  %v112 = vld [vmem:[%s1 + $0x18] sm:$0xff]
  %v113 = vld [vmem:[%s1 + $0x20] sm:$0xf]
  %v114 = vld [vmem:[%s1 + $0x24] sm:$0xff]
  %v115 = vld [vmem:[%s1 + $0x2c] sm:$0xf]
  %v116 = vld [vmem:[%s1 + $0x30] sm:$0xff]
  %v117 = vld [vmem:[%s1 + $0x38] sm:$0xf]
  %v118 = vld [vmem:[%s1 + $0x3c] sm:$0xff]
  %v119 = vld [vmem:[%s1 + $0x44] sm:$0xf]
  %v132 = vunpack.c.l.b16 %v108
  %v133 = vunpack.c.h.b16 %v108
  %v134 = vunpack.c.l.b16 %v109
  %v135 = vunpack.c.l.b16 %v110
  %v136 = vunpack.c.h.b16 %v110
  %v137 = vunpack.c.l.b16 %v111
  %v138 = vunpack.c.l.b16 %v112
  %v139 = vunpack.c.h.b16 %v112
  %v140 = vunpack.c.l.b16 %v113
  %v141 = vunpack.c.l.b16 %v114
  %v142 = vunpack.c.h.b16 %v114
  %v143 = vunpack.c.l.b16 %v115
  %v144 = vunpack.c.l.b16 %v116
  %v145 = vunpack.c.h.b16 %v116
  %v146 = vunpack.c.l.b16 %v117
  %v147 = vunpack.c.l.b16 %v118
  %v148 = vunpack.c.h.b16 %v118
  %v149 = vunpack.c.l.b16 %v119
  %v150 = vpack.c.b16 %v135, %v132
  %v151 = vpack.c.b16 %v136, %v133
  %v152 = vpack.c.b16 %v137, %v134
  %v153 = vpack.c.b16 %v141, %v138
  %v154 = vpack.c.b16 %v142, %v139
  %v155 = vpack.c.b16 %v143, %v140
  %v156 = vpack.c.b16 %v147, %v144
  %v157 = vpack.c.b16 %v148, %v145
  %v158 = vpack.c.b16 %v149, %v146
  %vm168 = vcmask 392192
  %v170 = vsel %vm168, %v76, 0
  %v173 = vsel %vm168, %v77, 0
  %v176 = vsel %vm168, %v78, 0
  %v179 = vsel %vm168, %v79, 0
  %v182 = vsel %vm168, %v80, 0
  %v185 = vsel %vm168, %v81, 0
  %v188 = vsel %vm168, %v82, 0
  %v191 = vsel %vm168, %v83, 0
  %v194 = vsel %vm168, %v84, 0
  %v197 = vsel %vm168, %v85, 0
  %v200 = vsel %vm168, %v86, 0
  %v203 = vsel %vm168, %v87, 0
  %v206 = vsel %vm168, %v88, 0
  %v209 = vsel %vm168, %v89, 0
  %v212 = vsel %vm168, %v90, 0
  %v215 = vsel %vm168, %v91, 0
  %v218 = vsel %vm168, %v92, 0
  %v221 = vsel %vm168, %v93, 0
  %v224 = vsel %vm168, %v94, 0
  %v227 = vsel %vm168, %v95, 0
  %v230 = vsel %vm168, %v96, 0
  %v233 = vsel %vm168, %v97, 0
  %v236 = vsel %vm168, %v98, 0
  %v239 = vsel %vm168, %v99, 0
  %v242 = vsel %vm168, %v100, 0
  %v245 = vsel %vm168, %v101, 0
  %v248 = vsel %vm168, %v102, 0
  %v251 = vsel %vm168, %v103, 0
  %v254 = vsel %vm168, %v104, 0
  %v257 = vsel %vm168, %v105, 0
  %v260 = vsel %vm168, %v106, 0
  %v263 = vsel %vm168, %v107, 0
  %265 = vmatpush.bf16.msra.mxu0 0
  %266 = vmatpush.bf16.msra.mxu0 0
  %267 = vmatpush.bf16.msra.mxu0 0
  %268 = vmatpush.bf16.msra.mxu0 0
  %269 = vmatpush.bf16.msra.mxu0 0
  %270 = vmatpush.bf16.msra.mxu0 %v156
  %271 = vmatpush.bf16.msra.mxu0 %v153
  %272 = vmatpush.bf16.msra.mxu0 %v150
  %273 = vmatmul.bf16.gmra.mxu0 %v170
  %v274 = vpop.f32.mrf.mxu0
  %v275 = vadd.f32 0.0, %v274
  %v276 = vpop.f32.mrf.mxu0
  %v277 = vadd.f32 0.0, %v276
  %278 = vmatmul.bf16.gmra.mxu0 %v173
  %v279 = vpop.f32.mrf.mxu0
  %v280 = vadd.f32 0.0, %v279
  %v281 = vpop.f32.mrf.mxu0
  %v282 = vadd.f32 0.0, %v281
  %283 = vmatmul.bf16.gmra.mxu0 %v176
  %v284 = vpop.f32.mrf.mxu0
  %v285 = vadd.f32 0.0, %v284
  %v286 = vpop.f32.mrf.mxu0
  %v287 = vadd.f32 0.0, %v286
  %288 = vmatmul.bf16.gmra.mxu0 %v179
  %v289 = vpop.f32.mrf.mxu0
  %v290 = vadd.f32 0.0, %v289
  %v291 = vpop.f32.mrf.mxu0
  %v292 = vadd.f32 0.0, %v291
  %293 = vmatmul.bf16.gmra.mxu0 %v182
  %v294 = vpop.f32.mrf.mxu0
  %v295 = vadd.f32 0.0, %v294
  %v296 = vpop.f32.mrf.mxu0
  %v297 = vadd.f32 0.0, %v296
  %298 = vmatmul.bf16.gmra.mxu0 %v185
  %v299 = vpop.f32.mrf.mxu0
  %v300 = vadd.f32 0.0, %v299
  %v301 = vpop.f32.mrf.mxu0
  %v302 = vadd.f32 0.0, %v301
  %303 = vmatmul.bf16.gmra.mxu0 %v188
  %v304 = vpop.f32.mrf.mxu0
  %v305 = vadd.f32 0.0, %v304
  %v306 = vpop.f32.mrf.mxu0
  %v307 = vadd.f32 0.0, %v306
  %308 = vmatmul.bf16.gmra.mxu0 %v191
  %v309 = vpop.f32.mrf.mxu0
  %v310 = vadd.f32 0.0, %v309
  %v311 = vpop.f32.mrf.mxu0
  %v312 = vadd.f32 0.0, %v311
  %313 = vmatmul.bf16.gmra.mxu0 %v194
  %v314 = vpop.f32.mrf.mxu0
  %v315 = vadd.f32 0.0, %v314
  %v316 = vpop.f32.mrf.mxu0
  %v317 = vadd.f32 0.0, %v316
  %318 = vmatmul.bf16.gmra.mxu0 %v197
  %v319 = vpop.f32.mrf.mxu0
  %v320 = vadd.f32 0.0, %v319
  %v321 = vpop.f32.mrf.mxu0
  %v322 = vadd.f32 0.0, %v321
  %323 = vmatmul.bf16.gmra.mxu0 %v200
  %v324 = vpop.f32.mrf.mxu0
  %v325 = vadd.f32 0.0, %v324
  %v326 = vpop.f32.mrf.mxu0
  %v327 = vadd.f32 0.0, %v326
  %328 = vmatmul.bf16.gmra.mxu0 %v203
  %v329 = vpop.f32.mrf.mxu0
  %v330 = vadd.f32 0.0, %v329
  %v331 = vpop.f32.mrf.mxu0
  %v332 = vadd.f32 0.0, %v331
  %333 = vmatmul.bf16.gmra.mxu0 %v206
  %v334 = vpop.f32.mrf.mxu0
  %v335 = vadd.f32 0.0, %v334
  %v336 = vpop.f32.mrf.mxu0
  %v337 = vadd.f32 0.0, %v336
  %338 = vmatmul.bf16.gmra.mxu0 %v209
  %v339 = vpop.f32.mrf.mxu0
  %v340 = vadd.f32 0.0, %v339
  %v341 = vpop.f32.mrf.mxu0
  %v342 = vadd.f32 0.0, %v341
  %343 = vmatmul.bf16.gmra.mxu0 %v212
  %v344 = vpop.f32.mrf.mxu0
  %v345 = vadd.f32 0.0, %v344
  %v346 = vpop.f32.mrf.mxu0
  %v347 = vadd.f32 0.0, %v346
  %348 = vmatmul.bf16.gmra.mxu0 %v215
  %v349 = vpop.f32.mrf.mxu0
  %v350 = vadd.f32 0.0, %v349
  %v351 = vpop.f32.mrf.mxu0
  %v352 = vadd.f32 0.0, %v351
  %353 = vmatmul.bf16.gmra.mxu0 %v218
  %v354 = vpop.f32.mrf.mxu0
  %v355 = vadd.f32 0.0, %v354
  %v356 = vpop.f32.mrf.mxu0
  %v357 = vadd.f32 0.0, %v356
  %358 = vmatmul.bf16.gmra.mxu0 %v221
  %v359 = vpop.f32.mrf.mxu0
  %v360 = vadd.f32 0.0, %v359
  %v361 = vpop.f32.mrf.mxu0
  %v362 = vadd.f32 0.0, %v361
  %363 = vmatmul.bf16.gmra.mxu0 %v224
  %v364 = vpop.f32.mrf.mxu0
  %v365 = vadd.f32 0.0, %v364
  %v366 = vpop.f32.mrf.mxu0
  %v367 = vadd.f32 0.0, %v366
  %368 = vmatmul.bf16.gmra.mxu0 %v227
  %v369 = vpop.f32.mrf.mxu0
  %v370 = vadd.f32 0.0, %v369
  %v371 = vpop.f32.mrf.mxu0
  %v372 = vadd.f32 0.0, %v371
  %373 = vmatmul.bf16.gmra.mxu0 %v230
  %v374 = vpop.f32.mrf.mxu0
  %v375 = vadd.f32 0.0, %v374
  %v376 = vpop.f32.mrf.mxu0
  %v377 = vadd.f32 0.0, %v376
  %378 = vmatmul.bf16.gmra.mxu0 %v233
  %v379 = vpop.f32.mrf.mxu0
  %v380 = vadd.f32 0.0, %v379
  %v381 = vpop.f32.mrf.mxu0
  %v382 = vadd.f32 0.0, %v381
  %383 = vmatmul.bf16.gmra.mxu0 %v236
  %v384 = vpop.f32.mrf.mxu0
  %v385 = vadd.f32 0.0, %v384
  %v386 = vpop.f32.mrf.mxu0
  %v387 = vadd.f32 0.0, %v386
  %388 = vmatmul.bf16.gmra.mxu0 %v239
  %v389 = vpop.f32.mrf.mxu0
  %v390 = vadd.f32 0.0, %v389
  %v391 = vpop.f32.mrf.mxu0
  %v392 = vadd.f32 0.0, %v391
  %393 = vmatmul.bf16.gmra.mxu0 %v242
  %v394 = vpop.f32.mrf.mxu0
  %v395 = vadd.f32 0.0, %v394
  %v396 = vpop.f32.mrf.mxu0
  %v397 = vadd.f32 0.0, %v396
  %398 = vmatmul.bf16.gmra.mxu0 %v245
  %v399 = vpop.f32.mrf.mxu0
  %v400 = vadd.f32 0.0, %v399
  %v401 = vpop.f32.mrf.mxu0
  %v402 = vadd.f32 0.0, %v401
  %403 = vmatmul.bf16.gmra.mxu0 %v248
  %v404 = vpop.f32.mrf.mxu0
  %v405 = vadd.f32 0.0, %v404
  %v406 = vpop.f32.mrf.mxu0
  %v407 = vadd.f32 0.0, %v406
  %408 = vmatmul.bf16.gmra.mxu0 %v251
  %v409 = vpop.f32.mrf.mxu0
  %v410 = vadd.f32 0.0, %v409
  %v411 = vpop.f32.mrf.mxu0
  %v412 = vadd.f32 0.0, %v411
  %413 = vmatmul.bf16.gmra.mxu0 %v254
  %v414 = vpop.f32.mrf.mxu0
  %v415 = vadd.f32 0.0, %v414
  %v416 = vpop.f32.mrf.mxu0
  %v417 = vadd.f32 0.0, %v416
  %418 = vmatmul.bf16.gmra.mxu0 %v257
  %v419 = vpop.f32.mrf.mxu0
  %v420 = vadd.f32 0.0, %v419
  %v421 = vpop.f32.mrf.mxu0
  %v422 = vadd.f32 0.0, %v421
  %423 = vmatmul.bf16.gmra.mxu0 %v260
  %v424 = vpop.f32.mrf.mxu0
  %v425 = vadd.f32 0.0, %v424
  %v426 = vpop.f32.mrf.mxu0
  %v427 = vadd.f32 0.0, %v426
  %428 = vmatmul.bf16.gmra.mxu0 %v263
  %v429 = vpop.f32.mrf.mxu0
  %v430 = vadd.f32 0.0, %v429
  %v431 = vpop.f32.mrf.mxu0
  %v432 = vadd.f32 0.0, %v431
  %433 = vdwg.mxu0
  %434 = vmatpush.bf16.msra.mxu0 0
  %435 = vmatpush.bf16.msra.mxu0 0
  %436 = vmatpush.bf16.msra.mxu0 0
  %437 = vmatpush.bf16.msra.mxu0 0
  %438 = vmatpush.bf16.msra.mxu0 0
  %439 = vmatpush.bf16.msra.mxu0 %v157
  %440 = vmatpush.bf16.msra.mxu0 %v154
  %441 = vmatpush.bf16.msra.mxu0 %v151
  %442 = vmatmul.bf16.gmra.mxu0 %v170
  %v443 = vpop.f32.mrf.mxu0
  %v444 = vadd.f32 0.0, %v443
  %v445 = vpop.f32.mrf.mxu0
  %v446 = vadd.f32 0.0, %v445
  %447 = vmatmul.bf16.gmra.mxu0 %v173
  %v448 = vpop.f32.mrf.mxu0
  %v449 = vadd.f32 0.0, %v448
  %v450 = vpop.f32.mrf.mxu0
  %v451 = vadd.f32 0.0, %v450
  %452 = vmatmul.bf16.gmra.mxu0 %v176
  %v453 = vpop.f32.mrf.mxu0
  %v454 = vadd.f32 0.0, %v453
  %v455 = vpop.f32.mrf.mxu0
  %v456 = vadd.f32 0.0, %v455
  %457 = vmatmul.bf16.gmra.mxu0 %v179
  %v458 = vpop.f32.mrf.mxu0
  %v459 = vadd.f32 0.0, %v458
  %v460 = vpop.f32.mrf.mxu0
  %v461 = vadd.f32 0.0, %v460
  %462 = vmatmul.bf16.gmra.mxu0 %v182
  %v463 = vpop.f32.mrf.mxu0
  %v464 = vadd.f32 0.0, %v463
  %v465 = vpop.f32.mrf.mxu0
  %v466 = vadd.f32 0.0, %v465
  %467 = vmatmul.bf16.gmra.mxu0 %v185
  %v468 = vpop.f32.mrf.mxu0
  %v469 = vadd.f32 0.0, %v468
  %v470 = vpop.f32.mrf.mxu0
  %v471 = vadd.f32 0.0, %v470
  %472 = vmatmul.bf16.gmra.mxu0 %v188
  %v473 = vpop.f32.mrf.mxu0
  %v474 = vadd.f32 0.0, %v473
  %v475 = vpop.f32.mrf.mxu0
  %v476 = vadd.f32 0.0, %v475
  %477 = vmatmul.bf16.gmra.mxu0 %v191
  %v478 = vpop.f32.mrf.mxu0
  %v479 = vadd.f32 0.0, %v478
  %v480 = vpop.f32.mrf.mxu0
  %v481 = vadd.f32 0.0, %v480
  %482 = vmatmul.bf16.gmra.mxu0 %v194
  %v483 = vpop.f32.mrf.mxu0
  %v484 = vadd.f32 0.0, %v483
  %v485 = vpop.f32.mrf.mxu0
  %v486 = vadd.f32 0.0, %v485
  %487 = vmatmul.bf16.gmra.mxu0 %v197
  %v488 = vpop.f32.mrf.mxu0
  %v489 = vadd.f32 0.0, %v488
  %v490 = vpop.f32.mrf.mxu0
  %v491 = vadd.f32 0.0, %v490
  %492 = vmatmul.bf16.gmra.mxu0 %v200
  %v493 = vpop.f32.mrf.mxu0
  %v494 = vadd.f32 0.0, %v493
  %v495 = vpop.f32.mrf.mxu0
  %v496 = vadd.f32 0.0, %v495
  %497 = vmatmul.bf16.gmra.mxu0 %v203
  %v498 = vpop.f32.mrf.mxu0
  %v499 = vadd.f32 0.0, %v498
  %v500 = vpop.f32.mrf.mxu0
  %v501 = vadd.f32 0.0, %v500
  %502 = vmatmul.bf16.gmra.mxu0 %v206
  %v503 = vpop.f32.mrf.mxu0
  %v504 = vadd.f32 0.0, %v503
  %v505 = vpop.f32.mrf.mxu0
  %v506 = vadd.f32 0.0, %v505
  %507 = vmatmul.bf16.gmra.mxu0 %v209
  %v508 = vpop.f32.mrf.mxu0
  %v509 = vadd.f32 0.0, %v508
  %v510 = vpop.f32.mrf.mxu0
  %v511 = vadd.f32 0.0, %v510
  %512 = vmatmul.bf16.gmra.mxu0 %v212
  %v513 = vpop.f32.mrf.mxu0
  %v514 = vadd.f32 0.0, %v513
  %v515 = vpop.f32.mrf.mxu0
  %v516 = vadd.f32 0.0, %v515
  %517 = vmatmul.bf16.gmra.mxu0 %v215
  %v518 = vpop.f32.mrf.mxu0
  %v519 = vadd.f32 0.0, %v518
  %v520 = vpop.f32.mrf.mxu0
  %v521 = vadd.f32 0.0, %v520
  %522 = vmatmul.bf16.gmra.mxu0 %v218
  %v523 = vpop.f32.mrf.mxu0
  %v524 = vadd.f32 0.0, %v523
  %v525 = vpop.f32.mrf.mxu0
  %v526 = vadd.f32 0.0, %v525
  %527 = vmatmul.bf16.gmra.mxu0 %v221
  %v528 = vpop.f32.mrf.mxu0
  %v529 = vadd.f32 0.0, %v528
  %v530 = vpop.f32.mrf.mxu0
  %v531 = vadd.f32 0.0, %v530
  %532 = vmatmul.bf16.gmra.mxu0 %v224
  %v533 = vpop.f32.mrf.mxu0
  %v534 = vadd.f32 0.0, %v533
  %v535 = vpop.f32.mrf.mxu0
  %v536 = vadd.f32 0.0, %v535
  %537 = vmatmul.bf16.gmra.mxu0 %v227
  %v538 = vpop.f32.mrf.mxu0
  %v539 = vadd.f32 0.0, %v538
  %v540 = vpop.f32.mrf.mxu0
  %v541 = vadd.f32 0.0, %v540
  %542 = vmatmul.bf16.gmra.mxu0 %v230
  %v543 = vpop.f32.mrf.mxu0
  %v544 = vadd.f32 0.0, %v543
  %v545 = vpop.f32.mrf.mxu0
  %v546 = vadd.f32 0.0, %v545
  %547 = vmatmul.bf16.gmra.mxu0 %v233
  %v548 = vpop.f32.mrf.mxu0
  %v549 = vadd.f32 0.0, %v548
  %v550 = vpop.f32.mrf.mxu0
  %v551 = vadd.f32 0.0, %v550
  %552 = vmatmul.bf16.gmra.mxu0 %v236
  %v553 = vpop.f32.mrf.mxu0
  %v554 = vadd.f32 0.0, %v553
  %v555 = vpop.f32.mrf.mxu0
  %v556 = vadd.f32 0.0, %v555
  %557 = vmatmul.bf16.gmra.mxu0 %v239
  %v558 = vpop.f32.mrf.mxu0
  %v559 = vadd.f32 0.0, %v558
  %v560 = vpop.f32.mrf.mxu0
  %v561 = vadd.f32 0.0, %v560
  %562 = vmatmul.bf16.gmra.mxu0 %v242
  %v563 = vpop.f32.mrf.mxu0
  %v564 = vadd.f32 0.0, %v563
  %v565 = vpop.f32.mrf.mxu0
  %v566 = vadd.f32 0.0, %v565
  %567 = vmatmul.bf16.gmra.mxu0 %v245
  %v568 = vpop.f32.mrf.mxu0
  %v569 = vadd.f32 0.0, %v568
  %v570 = vpop.f32.mrf.mxu0
  %v571 = vadd.f32 0.0, %v570
  %572 = vmatmul.bf16.gmra.mxu0 %v248
  %v573 = vpop.f32.mrf.mxu0
  %v574 = vadd.f32 0.0, %v573
  %v575 = vpop.f32.mrf.mxu0
  %v576 = vadd.f32 0.0, %v575
  %577 = vmatmul.bf16.gmra.mxu0 %v251
  %v578 = vpop.f32.mrf.mxu0
  %v579 = vadd.f32 0.0, %v578
  %v580 = vpop.f32.mrf.mxu0
  %v581 = vadd.f32 0.0, %v580
  %582 = vmatmul.bf16.gmra.mxu0 %v254
  %v583 = vpop.f32.mrf.mxu0
  %v584 = vadd.f32 0.0, %v583
  %v585 = vpop.f32.mrf.mxu0
  %v586 = vadd.f32 0.0, %v585
  %587 = vmatmul.bf16.gmra.mxu0 %v257
  %v588 = vpop.f32.mrf.mxu0
  %v589 = vadd.f32 0.0, %v588
  %v590 = vpop.f32.mrf.mxu0
  %v591 = vadd.f32 0.0, %v590
  %592 = vmatmul.bf16.gmra.mxu0 %v260
  %v593 = vpop.f32.mrf.mxu0
  %v594 = vadd.f32 0.0, %v593
  %v595 = vpop.f32.mrf.mxu0
  %v596 = vadd.f32 0.0, %v595
  %597 = vmatmul.bf16.gmra.mxu0 %v263
  %v598 = vpop.f32.mrf.mxu0
  %v599 = vadd.f32 0.0, %v598
  %v600 = vpop.f32.mrf.mxu0
  %v601 = vadd.f32 0.0, %v600
  %602 = vdwg.mxu0
  %603 = vmatpush.bf16.msra.mxu0 0
  %604 = vmatpush.bf16.msra.mxu0 0
  %605 = vmatpush.bf16.msra.mxu0 0
  %606 = vmatpush.bf16.msra.mxu0 0
  %607 = vmatpush.bf16.msra.mxu0 0
  %608 = vmatpush.bf16.msra.mxu0 %v158
  %609 = vmatpush.bf16.msra.mxu0 %v155
  %610 = vmatpush.bf16.msra.mxu0 %v152
  %611 = vmatmul.bf16.gmra.mxu0 %v170
  %v612 = vpop.f32.mrf.mxu0
  %v613 = vadd.f32 0.0, %v612
  %v614 = vpop.f32.mrf.mxu0
  %v615 = vadd.f32 0.0, %v614
  %616 = vmatmul.bf16.gmra.mxu0 %v173
  %v617 = vpop.f32.mrf.mxu0
  %v618 = vadd.f32 0.0, %v617
  %v619 = vpop.f32.mrf.mxu0
  %v620 = vadd.f32 0.0, %v619
  %621 = vmatmul.bf16.gmra.mxu0 %v176
  %v622 = vpop.f32.mrf.mxu0
  %v623 = vadd.f32 0.0, %v622
  %v624 = vpop.f32.mrf.mxu0
  %v625 = vadd.f32 0.0, %v624
  %626 = vmatmul.bf16.gmra.mxu0 %v179
  %v627 = vpop.f32.mrf.mxu0
  %v628 = vadd.f32 0.0, %v627
  %v629 = vpop.f32.mrf.mxu0
  %v630 = vadd.f32 0.0, %v629
  %631 = vmatmul.bf16.gmra.mxu0 %v182
  %v632 = vpop.f32.mrf.mxu0
  %v633 = vadd.f32 0.0, %v632
  %v634 = vpop.f32.mrf.mxu0
  %v635 = vadd.f32 0.0, %v634
  %636 = vmatmul.bf16.gmra.mxu0 %v185
  %v637 = vpop.f32.mrf.mxu0
  %v638 = vadd.f32 0.0, %v637
  %v639 = vpop.f32.mrf.mxu0
  %v640 = vadd.f32 0.0, %v639
  %641 = vmatmul.bf16.gmra.mxu0 %v188
  %v642 = vpop.f32.mrf.mxu0
  %v643 = vadd.f32 0.0, %v642
  %v644 = vpop.f32.mrf.mxu0
  %v645 = vadd.f32 0.0, %v644
  %646 = vmatmul.bf16.gmra.mxu0 %v191
  %v647 = vpop.f32.mrf.mxu0
  %v648 = vadd.f32 0.0, %v647
  %v649 = vpop.f32.mrf.mxu0
  %v650 = vadd.f32 0.0, %v649
  %651 = vmatmul.bf16.gmra.mxu0 %v194
  %v652 = vpop.f32.mrf.mxu0
  %v653 = vadd.f32 0.0, %v652
  %v654 = vpop.f32.mrf.mxu0
  %v655 = vadd.f32 0.0, %v654
  %656 = vmatmul.bf16.gmra.mxu0 %v197
  %v657 = vpop.f32.mrf.mxu0
  %v658 = vadd.f32 0.0, %v657
  %v659 = vpop.f32.mrf.mxu0
  %v660 = vadd.f32 0.0, %v659
  %661 = vmatmul.bf16.gmra.mxu0 %v200
  %v662 = vpop.f32.mrf.mxu0
  %v663 = vadd.f32 0.0, %v662
  %v664 = vpop.f32.mrf.mxu0
  %v665 = vadd.f32 0.0, %v664
  %666 = vmatmul.bf16.gmra.mxu0 %v203
  %v667 = vpop.f32.mrf.mxu0
  %v668 = vadd.f32 0.0, %v667
  %v669 = vpop.f32.mrf.mxu0
  %v670 = vadd.f32 0.0, %v669
  %671 = vmatmul.bf16.gmra.mxu0 %v206
  %v672 = vpop.f32.mrf.mxu0
  %v673 = vadd.f32 0.0, %v672
  %v674 = vpop.f32.mrf.mxu0
  %v675 = vadd.f32 0.0, %v674
  %676 = vmatmul.bf16.gmra.mxu0 %v209
  %v677 = vpop.f32.mrf.mxu0
  %v678 = vadd.f32 0.0, %v677
  %v679 = vpop.f32.mrf.mxu0
  %v680 = vadd.f32 0.0, %v679
  %681 = vmatmul.bf16.gmra.mxu0 %v212
  %v682 = vpop.f32.mrf.mxu0
  %v683 = vadd.f32 0.0, %v682
  %v684 = vpop.f32.mrf.mxu0
  %v685 = vadd.f32 0.0, %v684
  %686 = vmatmul.bf16.gmra.mxu0 %v215
  %v687 = vpop.f32.mrf.mxu0
  %v688 = vadd.f32 0.0, %v687
  %v689 = vpop.f32.mrf.mxu0
  %v690 = vadd.f32 0.0, %v689
  %691 = vmatmul.bf16.gmra.mxu0 %v218
  %v692 = vpop.f32.mrf.mxu0
  %v693 = vadd.f32 0.0, %v692
  %v694 = vpop.f32.mrf.mxu0
  %v695 = vadd.f32 0.0, %v694
  %696 = vmatmul.bf16.gmra.mxu0 %v221
  %v697 = vpop.f32.mrf.mxu0
  %v698 = vadd.f32 0.0, %v697
  %v699 = vpop.f32.mrf.mxu0
  %v700 = vadd.f32 0.0, %v699
  %701 = vmatmul.bf16.gmra.mxu0 %v224
  %v702 = vpop.f32.mrf.mxu0
  %v703 = vadd.f32 0.0, %v702
  %v704 = vpop.f32.mrf.mxu0
  %v705 = vadd.f32 0.0, %v704
  %706 = vmatmul.bf16.gmra.mxu0 %v227
  %v707 = vpop.f32.mrf.mxu0
  %v708 = vadd.f32 0.0, %v707
  %v709 = vpop.f32.mrf.mxu0
  %v710 = vadd.f32 0.0, %v709
  %711 = vmatmul.bf16.gmra.mxu0 %v230
  %v712 = vpop.f32.mrf.mxu0
  %v713 = vadd.f32 0.0, %v712
  %v714 = vpop.f32.mrf.mxu0
  %v715 = vadd.f32 0.0, %v714
  %716 = vmatmul.bf16.gmra.mxu0 %v233
  %v717 = vpop.f32.mrf.mxu0
  %v718 = vadd.f32 0.0, %v717
  %v719 = vpop.f32.mrf.mxu0
  %v720 = vadd.f32 0.0, %v719
  %721 = vmatmul.bf16.gmra.mxu0 %v236
  %v722 = vpop.f32.mrf.mxu0
  %v723 = vadd.f32 0.0, %v722
  %v724 = vpop.f32.mrf.mxu0
  %v725 = vadd.f32 0.0, %v724
  %726 = vmatmul.bf16.gmra.mxu0 %v239
  %v727 = vpop.f32.mrf.mxu0
  %v728 = vadd.f32 0.0, %v727
  %v729 = vpop.f32.mrf.mxu0
  %v730 = vadd.f32 0.0, %v729
  %731 = vmatmul.bf16.gmra.mxu0 %v242
  %v732 = vpop.f32.mrf.mxu0
  %v733 = vadd.f32 0.0, %v732
  %v734 = vpop.f32.mrf.mxu0
  %v735 = vadd.f32 0.0, %v734
  %736 = vmatmul.bf16.gmra.mxu0 %v245
  %v737 = vpop.f32.mrf.mxu0
  %v738 = vadd.f32 0.0, %v737
  %v739 = vpop.f32.mrf.mxu0
  %v740 = vadd.f32 0.0, %v739
  %741 = vmatmul.bf16.gmra.mxu0 %v248
  %v742 = vpop.f32.mrf.mxu0
  %v743 = vadd.f32 0.0, %v742
  %v744 = vpop.f32.mrf.mxu0
  %v745 = vadd.f32 0.0, %v744
  %746 = vmatmul.bf16.gmra.mxu0 %v251
  %v747 = vpop.f32.mrf.mxu0
  %v748 = vadd.f32 0.0, %v747
  %v749 = vpop.f32.mrf.mxu0
  %v750 = vadd.f32 0.0, %v749
  %751 = vmatmul.bf16.gmra.mxu0 %v254
  %v752 = vpop.f32.mrf.mxu0
  %v753 = vadd.f32 0.0, %v752
  %v754 = vpop.f32.mrf.mxu0
  %v755 = vadd.f32 0.0, %v754
  %756 = vmatmul.bf16.gmra.mxu0 %v257
  %v757 = vpop.f32.mrf.mxu0
  %v758 = vadd.f32 0.0, %v757
  %v759 = vpop.f32.mrf.mxu0
  %v760 = vadd.f32 0.0, %v759
  %761 = vmatmul.bf16.gmra.mxu0 %v260
  %v762 = vpop.f32.mrf.mxu0
  %v763 = vadd.f32 0.0, %v762
  %v764 = vpop.f32.mrf.mxu0
  %v765 = vadd.f32 0.0, %v764
  %766 = vmatmul.bf16.gmra.mxu0 %v263
  %v767 = vpop.f32.mrf.mxu0
  %v768 = vadd.f32 0.0, %v767
  %v769 = vpop.f32.mrf.mxu0
  %v770 = vadd.f32 0.0, %v769
  %771 = vdwg.mxu0
  %v772 = vpack.c.bf16 %v444, %v275
  %v773 = vpack.c.bf16 %v613, %v613
  %v774 = vpack.c.bf16 %v446, %v277
  %v775 = vpack.c.bf16 %v615, %v615
  %v776 = vpack.c.bf16 %v449, %v280
  %v777 = vpack.c.bf16 %v618, %v618
  %v778 = vpack.c.bf16 %v451, %v282
  %v779 = vpack.c.bf16 %v620, %v620
  %v780 = vpack.c.bf16 %v454, %v285
  %v781 = vpack.c.bf16 %v623, %v623
  %v782 = vpack.c.bf16 %v456, %v287
  %v783 = vpack.c.bf16 %v625, %v625
  %v784 = vpack.c.bf16 %v459, %v290
  %v785 = vpack.c.bf16 %v628, %v628
  %v786 = vpack.c.bf16 %v461, %v292
  %v787 = vpack.c.bf16 %v630, %v630
  %v788 = vpack.c.bf16 %v464, %v295
  %v789 = vpack.c.bf16 %v633, %v633
  %v790 = vpack.c.bf16 %v466, %v297
  %v791 = vpack.c.bf16 %v635, %v635
  %v792 = vpack.c.bf16 %v469, %v300
  %v793 = vpack.c.bf16 %v638, %v638
  %v794 = vpack.c.bf16 %v471, %v302
  %v795 = vpack.c.bf16 %v640, %v640
  %v796 = vpack.c.bf16 %v474, %v305
  %v797 = vpack.c.bf16 %v643, %v643
  %v798 = vpack.c.bf16 %v476, %v307
  %v799 = vpack.c.bf16 %v645, %v645
  %v800 = vpack.c.bf16 %v479, %v310
  %v801 = vpack.c.bf16 %v648, %v648
  %v802 = vpack.c.bf16 %v481, %v312
  %v803 = vpack.c.bf16 %v650, %v650
  %v804 = vpack.c.bf16 %v484, %v315
  %v805 = vpack.c.bf16 %v653, %v653
  %v806 = vpack.c.bf16 %v486, %v317
  %v807 = vpack.c.bf16 %v655, %v655
  %v808 = vpack.c.bf16 %v489, %v320
  %v809 = vpack.c.bf16 %v658, %v658
  %v810 = vpack.c.bf16 %v491, %v322
  %v811 = vpack.c.bf16 %v660, %v660
  %v812 = vpack.c.bf16 %v494, %v325
  %v813 = vpack.c.bf16 %v663, %v663
  %v814 = vpack.c.bf16 %v496, %v327
  %v815 = vpack.c.bf16 %v665, %v665
  %v816 = vpack.c.bf16 %v499, %v330
  %v817 = vpack.c.bf16 %v668, %v668
  %v818 = vpack.c.bf16 %v501, %v332
  %v819 = vpack.c.bf16 %v670, %v670
  %v820 = vpack.c.bf16 %v504, %v335
  %v821 = vpack.c.bf16 %v673, %v673
  %v822 = vpack.c.bf16 %v506, %v337
  %v823 = vpack.c.bf16 %v675, %v675
  %v824 = vpack.c.bf16 %v509, %v340
  %v825 = vpack.c.bf16 %v678, %v678
  %v826 = vpack.c.bf16 %v511, %v342
  %v827 = vpack.c.bf16 %v680, %v680
  %v828 = vpack.c.bf16 %v514, %v345
  %v829 = vpack.c.bf16 %v683, %v683
  %v830 = vpack.c.bf16 %v516, %v347
  %v831 = vpack.c.bf16 %v685, %v685
  %v832 = vpack.c.bf16 %v519, %v350
  %v833 = vpack.c.bf16 %v688, %v688
  %v834 = vpack.c.bf16 %v521, %v352
  %v835 = vpack.c.bf16 %v690, %v690
  %v836 = vpack.c.bf16 %v524, %v355
  %v837 = vpack.c.bf16 %v693, %v693
  %v838 = vpack.c.bf16 %v526, %v357
  %v839 = vpack.c.bf16 %v695, %v695
  %v840 = vpack.c.bf16 %v529, %v360
  %v841 = vpack.c.bf16 %v698, %v698
  %v842 = vpack.c.bf16 %v531, %v362
  %v843 = vpack.c.bf16 %v700, %v700
  %v844 = vpack.c.bf16 %v534, %v365
  %v845 = vpack.c.bf16 %v703, %v703
  %v846 = vpack.c.bf16 %v536, %v367
  %v847 = vpack.c.bf16 %v705, %v705
  %v848 = vpack.c.bf16 %v539, %v370
  %v849 = vpack.c.bf16 %v708, %v708
  %v850 = vpack.c.bf16 %v541, %v372
  %v851 = vpack.c.bf16 %v710, %v710
  %v852 = vpack.c.bf16 %v544, %v375
  %v853 = vpack.c.bf16 %v713, %v713
  %v854 = vpack.c.bf16 %v546, %v377
  %v855 = vpack.c.bf16 %v715, %v715
  %v856 = vpack.c.bf16 %v549, %v380
  %v857 = vpack.c.bf16 %v718, %v718
  %v858 = vpack.c.bf16 %v551, %v382
  %v859 = vpack.c.bf16 %v720, %v720
  %v860 = vpack.c.bf16 %v554, %v385
  %v861 = vpack.c.bf16 %v723, %v723
  %v862 = vpack.c.bf16 %v556, %v387
  %v863 = vpack.c.bf16 %v725, %v725
  %v864 = vpack.c.bf16 %v559, %v390
  %v865 = vpack.c.bf16 %v728, %v728
  %v866 = vpack.c.bf16 %v561, %v392
  %v867 = vpack.c.bf16 %v730, %v730
  %v868 = vpack.c.bf16 %v564, %v395
  %v869 = vpack.c.bf16 %v733, %v733
  %v870 = vpack.c.bf16 %v566, %v397
  %v871 = vpack.c.bf16 %v735, %v735
  %v872 = vpack.c.bf16 %v569, %v400
  %v873 = vpack.c.bf16 %v738, %v738
  %v874 = vpack.c.bf16 %v571, %v402
  %v875 = vpack.c.bf16 %v740, %v740
  %v876 = vpack.c.bf16 %v574, %v405
  %v877 = vpack.c.bf16 %v743, %v743
  %v878 = vpack.c.bf16 %v576, %v407
  %v879 = vpack.c.bf16 %v745, %v745
  %v880 = vpack.c.bf16 %v579, %v410
  %v881 = vpack.c.bf16 %v748, %v748
  %v882 = vpack.c.bf16 %v581, %v412
  %v883 = vpack.c.bf16 %v750, %v750
  %v884 = vpack.c.bf16 %v584, %v415
  %v885 = vpack.c.bf16 %v753, %v753
  %v886 = vpack.c.bf16 %v586, %v417
  %v887 = vpack.c.bf16 %v755, %v755
  %v888 = vpack.c.bf16 %v589, %v420
  %v889 = vpack.c.bf16 %v758, %v758
  %v890 = vpack.c.bf16 %v591, %v422
  %v891 = vpack.c.bf16 %v760, %v760
  %v892 = vpack.c.bf16 %v594, %v425
  %v893 = vpack.c.bf16 %v763, %v763
  %v894 = vpack.c.bf16 %v596, %v427
  %v895 = vpack.c.bf16 %v765, %v765
  %v896 = vpack.c.bf16 %v599, %v430
  %v897 = vpack.c.bf16 %v768, %v768
  %v898 = vpack.c.bf16 %v601, %v432
  %v899 = vpack.c.bf16 %v770, %v770
  %900 = vst [vmem:[%s2] sm:$0xff] %v772
  %vm901 = vcmask 969728
  %902 = vst.msk [vmem:[%s2 + $0x8] sm:$0xf] %vm901, %v773
  %903 = vst [vmem:[%s2 + $0xc] sm:$0xff] %v774
  %904 = vst.msk [vmem:[%s2 + $0x14] sm:$0xf] %vm901, %v775
  %905 = vst [vmem:[%s2 + $0x18] sm:$0xff] %v776
  %906 = vst.msk [vmem:[%s2 + $0x20] sm:$0xf] %vm901, %v777
  %907 = vst [vmem:[%s2 + $0x24] sm:$0xff] %v778
  %908 = vst.msk [vmem:[%s2 + $0x2c] sm:$0xf] %vm901, %v779
  %909 = vst [vmem:[%s2 + $0x30] sm:$0xff] %v780
  %910 = vst.msk [vmem:[%s2 + $0x38] sm:$0xf] %vm901, %v781
  %911 = vst [vmem:[%s2 + $0x3c] sm:$0xff] %v782
  %912 = vst.msk [vmem:[%s2 + $0x44] sm:$0xf] %vm901, %v783
  %913 = vst [vmem:[%s2 + $0x48] sm:$0xff] %v784
  %914 = vst.msk [vmem:[%s2 + $0x50] sm:$0xf] %vm901, %v785
  %915 = vst [vmem:[%s2 + $0x54] sm:$0xff] %v786
  %916 = vst.msk [vmem:[%s2 + $0x5c] sm:$0xf] %vm901, %v787
  %917 = vst [vmem:[%s2 + $0x60] sm:$0xff] %v788
  %918 = vst.msk [vmem:[%s2 + $0x68] sm:$0xf] %vm901, %v789
  %919 = vst [vmem:[%s2 + $0x6c] sm:$0xff] %v790
  %920 = vst.msk [vmem:[%s2 + $0x74] sm:$0xf] %vm901, %v791
  %921 = vst [vmem:[%s2 + $0x78] sm:$0xff] %v792
  %922 = vst.msk [vmem:[%s2 + $0x80] sm:$0xf] %vm901, %v793
  %923 = vst [vmem:[%s2 + $0x84] sm:$0xff] %v794
  %924 = vst.msk [vmem:[%s2 + $0x8c] sm:$0xf] %vm901, %v795
  %925 = vst [vmem:[%s2 + $0x90] sm:$0xff] %v796
  %926 = vst.msk [vmem:[%s2 + $0x98] sm:$0xf] %vm901, %v797
  %927 = vst [vmem:[%s2 + $0x9c] sm:$0xff] %v798
  %928 = vst.msk [vmem:[%s2 + $0xa4] sm:$0xf] %vm901, %v799
  %929 = vst [vmem:[%s2 + $0xa8] sm:$0xff] %v800
  %930 = vst.msk [vmem:[%s2 + $0xb0] sm:$0xf] %vm901, %v801
  %931 = vst [vmem:[%s2 + $0xb4] sm:$0xff] %v802
  %932 = vst.msk [vmem:[%s2 + $0xbc] sm:$0xf] %vm901, %v803
  %933 = vst [vmem:[%s2 + $0xc0] sm:$0xff] %v804
  %934 = vst.msk [vmem:[%s2 + $0xc8] sm:$0xf] %vm901, %v805
  %935 = vst [vmem:[%s2 + $0xcc] sm:$0xff] %v806
  %936 = vst.msk [vmem:[%s2 + $0xd4] sm:$0xf] %vm901, %v807
  %937 = vst [vmem:[%s2 + $0xd8] sm:$0xff] %v808
  %938 = vst.msk [vmem:[%s2 + $0xe0] sm:$0xf] %vm901, %v809
  %939 = vst [vmem:[%s2 + $0xe4] sm:$0xff] %v810
  %940 = vst.msk [vmem:[%s2 + $0xec] sm:$0xf] %vm901, %v811
  %941 = vst [vmem:[%s2 + $0xf0] sm:$0xff] %v812
  %942 = vst.msk [vmem:[%s2 + $0xf8] sm:$0xf] %vm901, %v813
  %943 = vst [vmem:[%s2 + $0xfc] sm:$0xff] %v814
  %944 = vst.msk [vmem:[%s2 + $0x104] sm:$0xf] %vm901, %v815
  %945 = vst [vmem:[%s2 + $0x108] sm:$0xff] %v816
  %946 = vst.msk [vmem:[%s2 + $0x110] sm:$0xf] %vm901, %v817
  %947 = vst [vmem:[%s2 + $0x114] sm:$0xff] %v818
  %948 = vst.msk [vmem:[%s2 + $0x11c] sm:$0xf] %vm901, %v819
  %949 = vst [vmem:[%s2 + $0x120] sm:$0xff] %v820
  %950 = vst.msk [vmem:[%s2 + $0x128] sm:$0xf] %vm901, %v821
  %951 = vst [vmem:[%s2 + $0x12c] sm:$0xff] %v822
  %952 = vst.msk [vmem:[%s2 + $0x134] sm:$0xf] %vm901, %v823
  %953 = vst [vmem:[%s2 + $0x138] sm:$0xff] %v824
  %954 = vst.msk [vmem:[%s2 + $0x140] sm:$0xf] %vm901, %v825
  %955 = vst [vmem:[%s2 + $0x144] sm:$0xff] %v826
  %956 = vst.msk [vmem:[%s2 + $0x14c] sm:$0xf] %vm901, %v827
  %957 = vst [vmem:[%s2 + $0x150] sm:$0xff] %v828
  %958 = vst.msk [vmem:[%s2 + $0x158] sm:$0xf] %vm901, %v829
  %959 = vst [vmem:[%s2 + $0x15c] sm:$0xff] %v830
  %960 = vst.msk [vmem:[%s2 + $0x164] sm:$0xf] %vm901, %v831
  %961 = vst [vmem:[%s2 + $0x168] sm:$0xff] %v832
  %962 = vst.msk [vmem:[%s2 + $0x170] sm:$0xf] %vm901, %v833
  %963 = vst [vmem:[%s2 + $0x174] sm:$0xff] %v834
  %964 = vst.msk [vmem:[%s2 + $0x17c] sm:$0xf] %vm901, %v835
  %965 = vst [vmem:[%s2 + $0x180] sm:$0xff] %v836
  %966 = vst.msk [vmem:[%s2 + $0x188] sm:$0xf] %vm901, %v837
  %967 = vst [vmem:[%s2 + $0x18c] sm:$0xff] %v838
  %968 = vst.msk [vmem:[%s2 + $0x194] sm:$0xf] %vm901, %v839
  %969 = vst [vmem:[%s2 + $0x198] sm:$0xff] %v840
  %970 = vst.msk [vmem:[%s2 + $0x1a0] sm:$0xf] %vm901, %v841
  %971 = vst [vmem:[%s2 + $0x1a4] sm:$0xff] %v842
  %972 = vst.msk [vmem:[%s2 + $0x1ac] sm:$0xf] %vm901, %v843
  %973 = vst [vmem:[%s2 + $0x1b0] sm:$0xff] %v844
  %974 = vst.msk [vmem:[%s2 + $0x1b8] sm:$0xf] %vm901, %v845
  %975 = vst [vmem:[%s2 + $0x1bc] sm:$0xff] %v846
  %976 = vst.msk [vmem:[%s2 + $0x1c4] sm:$0xf] %vm901, %v847
  %977 = vst [vmem:[%s2 + $0x1c8] sm:$0xff] %v848
  %978 = vst.msk [vmem:[%s2 + $0x1d0] sm:$0xf] %vm901, %v849
  %979 = vst [vmem:[%s2 + $0x1d4] sm:$0xff] %v850
  %980 = vst.msk [vmem:[%s2 + $0x1dc] sm:$0xf] %vm901, %v851
  %981 = vst [vmem:[%s2 + $0x1e0] sm:$0xff] %v852
  %982 = vst.msk [vmem:[%s2 + $0x1e8] sm:$0xf] %vm901, %v853
  %983 = vst [vmem:[%s2 + $0x1ec] sm:$0xff] %v854
  %984 = vst.msk [vmem:[%s2 + $0x1f4] sm:$0xf] %vm901, %v855
  %985 = vst [vmem:[%s2 + $0x1f8] sm:$0xff] %v856
  %986 = vst.msk [vmem:[%s2 + $0x200] sm:$0xf] %vm901, %v857
  %987 = vst [vmem:[%s2 + $0x204] sm:$0xff] %v858
  %988 = vst.msk [vmem:[%s2 + $0x20c] sm:$0xf] %vm901, %v859
  %989 = vst [vmem:[%s2 + $0x210] sm:$0xff] %v860
  %990 = vst.msk [vmem:[%s2 + $0x218] sm:$0xf] %vm901, %v861
  %991 = vst [vmem:[%s2 + $0x21c] sm:$0xff] %v862
  %992 = vst.msk [vmem:[%s2 + $0x224] sm:$0xf] %vm901, %v863
  %993 = vst [vmem:[%s2 + $0x228] sm:$0xff] %v864
  %994 = vst.msk [vmem:[%s2 + $0x230] sm:$0xf] %vm901, %v865
  %995 = vst [vmem:[%s2 + $0x234] sm:$0xff] %v866
  %996 = vst.msk [vmem:[%s2 + $0x23c] sm:$0xf] %vm901, %v867
  %997 = vst [vmem:[%s2 + $0x240] sm:$0xff] %v868
  %998 = vst.msk [vmem:[%s2 + $0x248] sm:$0xf] %vm901, %v869
  %999 = vst [vmem:[%s2 + $0x24c] sm:$0xff] %v870
  %1000 = vst.msk [vmem:[%s2 + $0x254] sm:$0xf] %vm901, %v871
  %1001 = vst [vmem:[%s2 + $0x258] sm:$0xff] %v872
  %1002 = vst.msk [vmem:[%s2 + $0x260] sm:$0xf] %vm901, %v873
  %1003 = vst [vmem:[%s2 + $0x264] sm:$0xff] %v874
  %1004 = vst.msk [vmem:[%s2 + $0x26c] sm:$0xf] %vm901, %v875
  %1005 = vst [vmem:[%s2 + $0x270] sm:$0xff] %v876
  %1006 = vst.msk [vmem:[%s2 + $0x278] sm:$0xf] %vm901, %v877
  %1007 = vst [vmem:[%s2 + $0x27c] sm:$0xff] %v878
  %1008 = vst.msk [vmem:[%s2 + $0x284] sm:$0xf] %vm901, %v879
  %1009 = vst [vmem:[%s2 + $0x288] sm:$0xff] %v880
  %1010 = vst.msk [vmem:[%s2 + $0x290] sm:$0xf] %vm901, %v881
  %1011 = vst [vmem:[%s2 + $0x294] sm:$0xff] %v882
  %1012 = vst.msk [vmem:[%s2 + $0x29c] sm:$0xf] %vm901, %v883
  %1013 = vst [vmem:[%s2 + $0x2a0] sm:$0xff] %v884
  %1014 = vst.msk [vmem:[%s2 + $0x2a8] sm:$0xf] %vm901, %v885
  %1015 = vst [vmem:[%s2 + $0x2ac] sm:$0xff] %v886
  %1016 = vst.msk [vmem:[%s2 + $0x2b4] sm:$0xf] %vm901, %v887
  %1017 = vst [vmem:[%s2 + $0x2b8] sm:$0xff] %v888
  %1018 = vst.msk [vmem:[%s2 + $0x2c0] sm:$0xf] %vm901, %v889
  %1019 = vst [vmem:[%s2 + $0x2c4] sm:$0xff] %v890
  %1020 = vst.msk [vmem:[%s2 + $0x2cc] sm:$0xf] %vm901, %v891
  %1021 = vst [vmem:[%s2 + $0x2d0] sm:$0xff] %v892
  %1022 = vst.msk [vmem:[%s2 + $0x2d8] sm:$0xf] %vm901, %v893
  %1023 = vst [vmem:[%s2 + $0x2dc] sm:$0xff] %v894
  %1024 = vst.msk [vmem:[%s2 + $0x2e4] sm:$0xf] %vm901, %v895
  %1025 = vst [vmem:[%s2 + $0x2e8] sm:$0xff] %v896
  %1026 = vst.msk [vmem:[%s2 + $0x2f0] sm:$0xf] %vm901, %v897
  %1027 = vst [vmem:[%s2 + $0x2f4] sm:$0xff] %v898
  %1028 = vst.msk [vmem:[%s2 + $0x2fc] sm:$0xf] %vm901, %v899
  // Predicated region
  $region10: #{_lambda_.2} parent=0 // pred_check
    _
  $region11: #{_lambda_.2} parent=0 // pred_check_branch
    %1030 = sbr.rel (0) target = $region13
  $region12: #{_lambda_.2} parent=0 // pred_region
    _
  $region13: #{_lambda_.2} parent=0 // pred_fallthru
    _
  // Predicated region
  $region14: #{_lambda_.2} parent=0 // pred_check
    _
  $region15: #{_lambda_.2} parent=0 // pred_check_branch
    %1032 = sbr.rel (0) target = $region17
  $region16: #{_lambda_.2} parent=0 // pred_region
    _
  $region17: #{_lambda_.2} parent=0 // pred_fallthru
    _

// kernel: _lambda_.3
$region0: #{_lambda_.3}
  #allocation0 [shape = 'u32[]', space=smem, size = 0x4, offset = 0x4, fixed_abs, tag = 'smem constant byte address 0x4 - core index']
  #allocation1 [shape = 'u32[72,128]{1,0:T(1,128)}', space=vmem, size = 0x9000, scoped, tag = 'internal scratch']
  %s0 = inlined_call_operand.vmem [shape: bf16[1000,192], index: 0, kind: input, shape index: {}]
  %s1 = inlined_call_operand.vmem [shape: bf16[192,125], index: 1, kind: input, shape index: {}]
  %s2 = inlined_call_operand.vmem [shape: f32[1000,125], index: 2, kind: input, shape index: {}]
  %s3 = inlined_call_operand.vmem [shape: f32[1000,125], index: 3, kind: output, shape index: {}]
  %s4 = sld [smem:[#allocation0]]
  $region22: #{_lambda_.3} parent=0
    _
  %s6 = ssub.s32 1, %s4
  %s7 = scalar_select 0, %s6, %s4
  // Predicated region
  $region2: #{_lambda_.3} parent=0 // pred_check
    _
  $region3: #{_lambda_.3} parent=0 // pred_check_branch
    %9 = sbr.rel (0) target = $region5
  $region4: #{_lambda_.3} parent=0 // pred_region
    _
  $region5: #{_lambda_.3} parent=0 // pred_fallthru
    _
  // Predicated region
  $region6: #{_lambda_.3} parent=0 // pred_check
    _
  $region7: #{_lambda_.3} parent=0 // pred_check_branch
    %11 = sbr.rel (0) target = $region9
  $region8: #{_lambda_.3} parent=0 // pred_region
    _
  $region9: #{_lambda_.3} parent=0 // pred_fallthru
    _
  // Predicated region
  $region10: #{_lambda_.3} parent=0 // pred_check
    _
  $region11: #{_lambda_.3} parent=0 // pred_check_branch
    %13 = sbr.rel (0) target = $region13
  $region12: #{_lambda_.3} parent=0 // pred_region
    _
  $region13: #{_lambda_.3} parent=0 // pred_fallthru
    _
  %v15 = vld [vmem:[%s0] sm:$0xff]
  %v16 = vld [vmem:[%s0 + $0x8] sm:$0xff]
  %v17 = vld [vmem:[%s0 + $0x10] sm:$0xff]
  %v18 = vld [vmem:[%s0 + $0x18] sm:$0xff]
  %v19 = vld [vmem:[%s0 + $0x20] sm:$0xff]
  %v20 = vld [vmem:[%s0 + $0x28] sm:$0xff]
  %v21 = vld [vmem:[%s0 + $0x30] sm:$0xff]
  %v22 = vld [vmem:[%s0 + $0x38] sm:$0xff]
  %v23 = vld [vmem:[%s0 + $0x40] sm:$0xff]
  %v24 = vld [vmem:[%s0 + $0x48] sm:$0xff]
  %v25 = vld [vmem:[%s0 + $0x50] sm:$0xff]
  %v26 = vld [vmem:[%s0 + $0x58] sm:$0xff]
  %v27 = vld [vmem:[%s0 + $0x60] sm:$0xff]
  %v28 = vld [vmem:[%s0 + $0x68] sm:$0xff]
  %v29 = vld [vmem:[%s0 + $0x70] sm:$0xff]
  %v30 = vld [vmem:[%s0 + $0x78] sm:$0xff]
  %v31 = vld [vmem:[%s0 + $0x80] sm:$0xff]
  %v32 = vld [vmem:[%s0 + $0x88] sm:$0xff]
  %v33 = vld [vmem:[%s0 + $0x90] sm:$0xff]
  %v34 = vld [vmem:[%s0 + $0x98] sm:$0xff]
  %v35 = vld [vmem:[%s0 + $0xa0] sm:$0xff]
  %v36 = vld [vmem:[%s0 + $0xa8] sm:$0xff]
  %v37 = vld [vmem:[%s0 + $0xb0] sm:$0xff]
  %v38 = vld [vmem:[%s0 + $0xb8] sm:$0xff]
  %v39 = vld [vmem:[%s0 + $0xc0] sm:$0xff]
  %v40 = vld [vmem:[%s0 + $0xc8] sm:$0xff]
  %v41 = vld [vmem:[%s0 + $0xd0] sm:$0xff]
  %v42 = vld [vmem:[%s0 + $0xd8] sm:$0xff]
  %v43 = vld [vmem:[%s0 + $0xe0] sm:$0xff]
  %v44 = vld [vmem:[%s0 + $0xe8] sm:$0xff]
  %v45 = vld [vmem:[%s0 + $0xf0] sm:$0xff]
  %v46 = vld [vmem:[%s0 + $0xf8] sm:$0xff]
  %v47 = vld [vmem:[%s0 + $0x100] sm:$0xff]
  %v48 = vld [vmem:[%s0 + $0x108] sm:$0xff]
  %v49 = vld [vmem:[%s0 + $0x110] sm:$0xff]
  %v50 = vld [vmem:[%s0 + $0x118] sm:$0xff]
  %v51 = vld [vmem:[%s0 + $0x120] sm:$0xff]
  %v52 = vld [vmem:[%s0 + $0x128] sm:$0xff]
  %v53 = vld [vmem:[%s0 + $0x130] sm:$0xff]
  %v54 = vld [vmem:[%s0 + $0x138] sm:$0xff]
  %v55 = vld [vmem:[%s0 + $0x140] sm:$0xff]
  %v56 = vld [vmem:[%s0 + $0x148] sm:$0xff]
  %v57 = vld [vmem:[%s0 + $0x150] sm:$0xff]
  %v58 = vld [vmem:[%s0 + $0x158] sm:$0xff]
  %v59 = vld [vmem:[%s0 + $0x160] sm:$0xff]
  %v60 = vld [vmem:[%s0 + $0x168] sm:$0xff]
  %v61 = vld [vmem:[%s0 + $0x170] sm:$0xff]
  %v62 = vld [vmem:[%s0 + $0x178] sm:$0xff]
  %v63 = vld [vmem:[%s0 + $0x180] sm:$0xff]
  %v64 = vld [vmem:[%s0 + $0x188] sm:$0xff]
  %v65 = vld [vmem:[%s0 + $0x190] sm:$0xff]
  %v66 = vld [vmem:[%s0 + $0x198] sm:$0xff]
  %v67 = vld [vmem:[%s0 + $0x1a0] sm:$0xff]
  %v68 = vld [vmem:[%s0 + $0x1a8] sm:$0xff]
  %v69 = vld [vmem:[%s0 + $0x1b0] sm:$0xff]
  %v70 = vld [vmem:[%s0 + $0x1b8] sm:$0xff]
  %v71 = vld [vmem:[%s0 + $0x1c0] sm:$0xff]
  %v72 = vld [vmem:[%s0 + $0x1c8] sm:$0xff]
  %v73 = vld [vmem:[%s0 + $0x1d0] sm:$0xff]
  %v74 = vld [vmem:[%s0 + $0x1d8] sm:$0xff]
  %v75 = vld [vmem:[%s0 + $0x1e0] sm:$0xff]
  %v76 = vld [vmem:[%s0 + $0x1e8] sm:$0xff]
  %v77 = vld [vmem:[%s0 + $0x1f0] sm:$0xff]
  %v78 = vld [vmem:[%s0 + $0x1f8] sm:$0xff]
  %v79 = vld [vmem:[%s0 + $0x200] sm:$0xff]
  %v80 = vld [vmem:[%s0 + $0x208] sm:$0xff]
  %v81 = vld [vmem:[%s0 + $0x210] sm:$0xff]
  %v82 = vld [vmem:[%s0 + $0x218] sm:$0xff]
  %v83 = vld [vmem:[%s0 + $0x220] sm:$0xff]
  %v84 = vld [vmem:[%s0 + $0x228] sm:$0xff]
  %v85 = vld [vmem:[%s0 + $0x230] sm:$0xff]
  %v86 = vld [vmem:[%s0 + $0x238] sm:$0xff]
  %v87 = vld [vmem:[%s0 + $0x240] sm:$0xff]
  %v88 = vld [vmem:[%s0 + $0x248] sm:$0xff]
  %v89 = vld [vmem:[%s0 + $0x250] sm:$0xff]
  %v90 = vld [vmem:[%s0 + $0x258] sm:$0xff]
  %v91 = vld [vmem:[%s0 + $0x260] sm:$0xff]
  %v92 = vld [vmem:[%s0 + $0x268] sm:$0xff]
  %v93 = vld [vmem:[%s0 + $0x270] sm:$0xff]
  %v94 = vld [vmem:[%s0 + $0x278] sm:$0xff]
  %v95 = vld [vmem:[%s0 + $0x280] sm:$0xff]
  %v96 = vld [vmem:[%s0 + $0x288] sm:$0xff]
  %v97 = vld [vmem:[%s0 + $0x290] sm:$0xff]
  %v98 = vld [vmem:[%s0 + $0x298] sm:$0xff]
  %v99 = vld [vmem:[%s0 + $0x2a0] sm:$0xff]
  %v100 = vld [vmem:[%s0 + $0x2a8] sm:$0xff]
  %v101 = vld [vmem:[%s0 + $0x2b0] sm:$0xff]
  %v102 = vld [vmem:[%s0 + $0x2b8] sm:$0xff]
  %v103 = vld [vmem:[%s0 + $0x2c0] sm:$0xff]
  %v104 = vld [vmem:[%s0 + $0x2c8] sm:$0xff]
  %v105 = vld [vmem:[%s0 + $0x2d0] sm:$0xff]
  %v106 = vld [vmem:[%s0 + $0x2d8] sm:$0xff]
  %v107 = vld [vmem:[%s0 + $0x2e0] sm:$0xff]
  %v108 = vld [vmem:[%s0 + $0x2e8] sm:$0xff]
  %v109 = vld [vmem:[%s0 + $0x2f0] sm:$0xff]
  %v110 = vld [vmem:[%s0 + $0x2f8] sm:$0xff]
  %v111 = vld [vmem:[%s0 + $0x300] sm:$0xff]
  %v112 = vld [vmem:[%s0 + $0x308] sm:$0xff]
  %v113 = vld [vmem:[%s0 + $0x310] sm:$0xff]
  %v114 = vld [vmem:[%s0 + $0x318] sm:$0xff]
  %v115 = vld [vmem:[%s0 + $0x320] sm:$0xff]
  %v116 = vld [vmem:[%s0 + $0x328] sm:$0xff]
  %v117 = vld [vmem:[%s0 + $0x330] sm:$0xff]
  %v118 = vld [vmem:[%s0 + $0x338] sm:$0xff]
  %v119 = vld [vmem:[%s0 + $0x340] sm:$0xff]
  %v120 = vld [vmem:[%s0 + $0x348] sm:$0xff]
  %v121 = vld [vmem:[%s0 + $0x350] sm:$0xff]
  %v122 = vld [vmem:[%s0 + $0x358] sm:$0xff]
  %v123 = vld [vmem:[%s0 + $0x360] sm:$0xff]
  %v124 = vld [vmem:[%s0 + $0x368] sm:$0xff]
  %v125 = vld [vmem:[%s0 + $0x370] sm:$0xff]
  %v126 = vld [vmem:[%s0 + $0x378] sm:$0xff]
  %v127 = vld [vmem:[%s0 + $0x380] sm:$0xff]
  %v128 = vld [vmem:[%s0 + $0x388] sm:$0xff]
  %v129 = vld [vmem:[%s0 + $0x390] sm:$0xff]
  %v130 = vld [vmem:[%s0 + $0x398] sm:$0xff]
  %v131 = vld [vmem:[%s0 + $0x3a0] sm:$0xff]
  %v132 = vld [vmem:[%s0 + $0x3a8] sm:$0xff]
  %v133 = vld [vmem:[%s0 + $0x3b0] sm:$0xff]
  %v134 = vld [vmem:[%s0 + $0x3b8] sm:$0xff]
  %v135 = vld [vmem:[%s0 + $0x3c0] sm:$0xff]
  %v136 = vld [vmem:[%s0 + $0x3c8] sm:$0xff]
  %v137 = vld [vmem:[%s0 + $0x3d0] sm:$0xff]
  %v138 = vld [vmem:[%s0 + $0x3d8] sm:$0xff]
  %v139 = vld [vmem:[%s0 + $0x3e0] sm:$0xff]
  %v140 = vld [vmem:[%s1] sm:$0xf]
  %v141 = vld [vmem:[%s1 + $0x4] sm:$0xf]
  %v142 = vld [vmem:[%s1 + $0x8] sm:$0xf]
  %v143 = vld [vmem:[%s1 + $0xc] sm:$0xf]
  %v144 = vld [vmem:[%s1 + $0x10] sm:$0xf]
  %v145 = vld [vmem:[%s1 + $0x14] sm:$0xf]
  %v146 = vld [vmem:[%s1 + $0x18] sm:$0xf]
  %v147 = vld [vmem:[%s1 + $0x1c] sm:$0xf]
  %v148 = vld [vmem:[%s1 + $0x20] sm:$0xf]
  %v149 = vld [vmem:[%s1 + $0x24] sm:$0xf]
  %v150 = vld [vmem:[%s1 + $0x28] sm:$0xf]
  %v151 = vld [vmem:[%s1 + $0x2c] sm:$0xf]
  %v152 = vld [vmem:[%s1 + $0x30] sm:$0xf]
  %v153 = vld [vmem:[%s1 + $0x34] sm:$0xf]
  %v154 = vld [vmem:[%s1 + $0x38] sm:$0xf]
  %v155 = vld [vmem:[%s1 + $0x3c] sm:$0xf]
  %v156 = vld [vmem:[%s1 + $0x40] sm:$0xf]
  %v157 = vld [vmem:[%s1 + $0x44] sm:$0xf]
  %v158 = vld [vmem:[%s1 + $0x48] sm:$0xf]
  %v159 = vld [vmem:[%s1 + $0x4c] sm:$0xf]
  %v160 = vld [vmem:[%s1 + $0x50] sm:$0xf]
  %v161 = vld [vmem:[%s1 + $0x54] sm:$0xf]
  %v162 = vld [vmem:[%s1 + $0x58] sm:$0xf]
  %v163 = vld [vmem:[%s1 + $0x5c] sm:$0xf]
  %v164 = vld [vmem:[%s2] sm:$0xff]
  %v165 = vld [vmem:[%s2 + $0x8] sm:$0xff]
  %v166 = vld [vmem:[%s2 + $0x10] sm:$0xff]
  %v167 = vld [vmem:[%s2 + $0x18] sm:$0xff]
  %v168 = vld [vmem:[%s2 + $0x20] sm:$0xff]
  %v169 = vld [vmem:[%s2 + $0x28] sm:$0xff]
  %v170 = vld [vmem:[%s2 + $0x30] sm:$0xff]
  %v171 = vld [vmem:[%s2 + $0x38] sm:$0xff]
  %v172 = vld [vmem:[%s2 + $0x40] sm:$0xff]
  %v173 = vld [vmem:[%s2 + $0x48] sm:$0xff]
  %v174 = vld [vmem:[%s2 + $0x50] sm:$0xff]
  %v175 = vld [vmem:[%s2 + $0x58] sm:$0xff]
  %v176 = vld [vmem:[%s2 + $0x60] sm:$0xff]
  %v177 = vld [vmem:[%s2 + $0x68] sm:$0xff]
  %v178 = vld [vmem:[%s2 + $0x70] sm:$0xff]
  %v179 = vld [vmem:[%s2 + $0x78] sm:$0xff]
  %v180 = vld [vmem:[%s2 + $0x80] sm:$0xff]
  %v181 = vld [vmem:[%s2 + $0x88] sm:$0xff]
  %v182 = vld [vmem:[%s2 + $0x90] sm:$0xff]
  %v183 = vld [vmem:[%s2 + $0x98] sm:$0xff]
  %v184 = vld [vmem:[%s2 + $0xa0] sm:$0xff]
  %v185 = vld [vmem:[%s2 + $0xa8] sm:$0xff]
  %v186 = vld [vmem:[%s2 + $0xb0] sm:$0xff]
  %v187 = vld [vmem:[%s2 + $0xb8] sm:$0xff]
  %v188 = vld [vmem:[%s2 + $0xc0] sm:$0xff]
  %v189 = vld [vmem:[%s2 + $0xc8] sm:$0xff]
  %v190 = vld [vmem:[%s2 + $0xd0] sm:$0xff]
  %v191 = vld [vmem:[%s2 + $0xd8] sm:$0xff]
  %v192 = vld [vmem:[%s2 + $0xe0] sm:$0xff]
  %v193 = vld [vmem:[%s2 + $0xe8] sm:$0xff]
  %v194 = vld [vmem:[%s2 + $0xf0] sm:$0xff]
  %v195 = vld [vmem:[%s2 + $0xf8] sm:$0xff]
  %v196 = vld [vmem:[%s2 + $0x100] sm:$0xff]
  %v197 = vld [vmem:[%s2 + $0x108] sm:$0xff]
  %v198 = vld [vmem:[%s2 + $0x110] sm:$0xff]
  %v199 = vld [vmem:[%s2 + $0x118] sm:$0xff]
  %v200 = vld [vmem:[%s2 + $0x120] sm:$0xff]
  %v201 = vld [vmem:[%s2 + $0x128] sm:$0xff]
  %v202 = vld [vmem:[%s2 + $0x130] sm:$0xff]
  %v203 = vld [vmem:[%s2 + $0x138] sm:$0xff]
  %v204 = vld [vmem:[%s2 + $0x140] sm:$0xff]
  %v205 = vld [vmem:[%s2 + $0x148] sm:$0xff]
  %v206 = vld [vmem:[%s2 + $0x150] sm:$0xff]
  %v207 = vld [vmem:[%s2 + $0x158] sm:$0xff]
  %v208 = vld [vmem:[%s2 + $0x160] sm:$0xff]
  %v209 = vld [vmem:[%s2 + $0x168] sm:$0xff]
  %v210 = vld [vmem:[%s2 + $0x170] sm:$0xff]
  %v211 = vld [vmem:[%s2 + $0x178] sm:$0xff]
  %v212 = vld [vmem:[%s2 + $0x180] sm:$0xff]
  %v213 = vld [vmem:[%s2 + $0x188] sm:$0xff]
  %v214 = vld [vmem:[%s2 + $0x190] sm:$0xff]
  %v215 = vld [vmem:[%s2 + $0x198] sm:$0xff]
  %v216 = vld [vmem:[%s2 + $0x1a0] sm:$0xff]
  %v217 = vld [vmem:[%s2 + $0x1a8] sm:$0xff]
  %v218 = vld [vmem:[%s2 + $0x1b0] sm:$0xff]
  %v219 = vld [vmem:[%s2 + $0x1b8] sm:$0xff]
  %v220 = vld [vmem:[%s2 + $0x1c0] sm:$0xff]
  %v221 = vld [vmem:[%s2 + $0x1c8] sm:$0xff]
  %v222 = vld [vmem:[%s2 + $0x1d0] sm:$0xff]
  %v223 = vld [vmem:[%s2 + $0x1d8] sm:$0xff]
  %v224 = vld [vmem:[%s2 + $0x1e0] sm:$0xff]
  %v225 = vld [vmem:[%s2 + $0x1e8] sm:$0xff]
  %v226 = vld [vmem:[%s2 + $0x1f0] sm:$0xff]
  %v227 = vld [vmem:[%s2 + $0x1f8] sm:$0xff]
  %v228 = vld [vmem:[%s2 + $0x200] sm:$0xff]
  %v229 = vld [vmem:[%s2 + $0x208] sm:$0xff]
  %v230 = vld [vmem:[%s2 + $0x210] sm:$0xff]
  %v231 = vld [vmem:[%s2 + $0x218] sm:$0xff]
  %v232 = vld [vmem:[%s2 + $0x220] sm:$0xff]
  %v233 = vld [vmem:[%s2 + $0x228] sm:$0xff]
  %v234 = vld [vmem:[%s2 + $0x230] sm:$0xff]
  %v235 = vld [vmem:[%s2 + $0x238] sm:$0xff]
  %v236 = vld [vmem:[%s2 + $0x240] sm:$0xff]
  %v237 = vld [vmem:[%s2 + $0x248] sm:$0xff]
  %v238 = vld [vmem:[%s2 + $0x250] sm:$0xff]
  %v239 = vld [vmem:[%s2 + $0x258] sm:$0xff]
  %v240 = vld [vmem:[%s2 + $0x260] sm:$0xff]
  %v241 = vld [vmem:[%s2 + $0x268] sm:$0xff]
  %v242 = vld [vmem:[%s2 + $0x270] sm:$0xff]
  %v243 = vld [vmem:[%s2 + $0x278] sm:$0xff]
  %v244 = vld [vmem:[%s2 + $0x280] sm:$0xff]
  %v245 = vld [vmem:[%s2 + $0x288] sm:$0xff]
  %v246 = vld [vmem:[%s2 + $0x290] sm:$0xff]
  %v247 = vld [vmem:[%s2 + $0x298] sm:$0xff]
  %v248 = vld [vmem:[%s2 + $0x2a0] sm:$0xff]
  %v249 = vld [vmem:[%s2 + $0x2a8] sm:$0xff]
  %v250 = vld [vmem:[%s2 + $0x2b0] sm:$0xff]
  %v251 = vld [vmem:[%s2 + $0x2b8] sm:$0xff]
  %v252 = vld [vmem:[%s2 + $0x2c0] sm:$0xff]
  %v253 = vld [vmem:[%s2 + $0x2c8] sm:$0xff]
  %v254 = vld [vmem:[%s2 + $0x2d0] sm:$0xff]
  %v255 = vld [vmem:[%s2 + $0x2d8] sm:$0xff]
  %v256 = vld [vmem:[%s2 + $0x2e0] sm:$0xff]
  %v257 = vld [vmem:[%s2 + $0x2e8] sm:$0xff]
  %v258 = vld [vmem:[%s2 + $0x2f0] sm:$0xff]
  %v259 = vld [vmem:[%s2 + $0x2f8] sm:$0xff]
  %v260 = vld [vmem:[%s2 + $0x300] sm:$0xff]
  %v261 = vld [vmem:[%s2 + $0x308] sm:$0xff]
  %v262 = vld [vmem:[%s2 + $0x310] sm:$0xff]
  %v263 = vld [vmem:[%s2 + $0x318] sm:$0xff]
  %v264 = vld [vmem:[%s2 + $0x320] sm:$0xff]
  %v265 = vld [vmem:[%s2 + $0x328] sm:$0xff]
  %v266 = vld [vmem:[%s2 + $0x330] sm:$0xff]
  %v267 = vld [vmem:[%s2 + $0x338] sm:$0xff]
  %v268 = vld [vmem:[%s2 + $0x340] sm:$0xff]
  %v269 = vld [vmem:[%s2 + $0x348] sm:$0xff]
  %v270 = vld [vmem:[%s2 + $0x350] sm:$0xff]
  %v271 = vld [vmem:[%s2 + $0x358] sm:$0xff]
  %v272 = vld [vmem:[%s2 + $0x360] sm:$0xff]
  %v273 = vld [vmem:[%s2 + $0x368] sm:$0xff]
  %v274 = vld [vmem:[%s2 + $0x370] sm:$0xff]
  %v275 = vld [vmem:[%s2 + $0x378] sm:$0xff]
  %v276 = vld [vmem:[%s2 + $0x380] sm:$0xff]
  %v277 = vld [vmem:[%s2 + $0x388] sm:$0xff]
  %v278 = vld [vmem:[%s2 + $0x390] sm:$0xff]
  %v279 = vld [vmem:[%s2 + $0x398] sm:$0xff]
  %v280 = vld [vmem:[%s2 + $0x3a0] sm:$0xff]
  %v281 = vld [vmem:[%s2 + $0x3a8] sm:$0xff]
  %v282 = vld [vmem:[%s2 + $0x3b0] sm:$0xff]
  %v283 = vld [vmem:[%s2 + $0x3b8] sm:$0xff]
  %v284 = vld [vmem:[%s2 + $0x3c0] sm:$0xff]
  %v285 = vld [vmem:[%s2 + $0x3c8] sm:$0xff]
  %v286 = vld [vmem:[%s2 + $0x3d0] sm:$0xff]
  %v287 = vld [vmem:[%s2 + $0x3d8] sm:$0xff]
  %v288 = vld [vmem:[%s2 + $0x3e0] sm:$0xff]
  %v414 = vunpack.c.l.b16 %v15
  %v415 = vunpack.c.h.b16 %v15
  %v416 = vunpack.c.l.b16 %v16
  %v417 = vunpack.c.h.b16 %v16
  %v418 = vunpack.c.l.b16 %v17
  %v419 = vunpack.c.h.b16 %v17
  %v420 = vunpack.c.l.b16 %v18
  %v421 = vunpack.c.h.b16 %v18
  %v422 = vunpack.c.l.b16 %v19
  %v423 = vunpack.c.h.b16 %v19
  %v424 = vunpack.c.l.b16 %v20
  %v425 = vunpack.c.h.b16 %v20
  %v426 = vunpack.c.l.b16 %v21
  %v427 = vunpack.c.h.b16 %v21
  %v428 = vunpack.c.l.b16 %v22
  %v429 = vunpack.c.h.b16 %v22
  %v430 = vunpack.c.l.b16 %v23
  %v431 = vunpack.c.h.b16 %v23
  %v432 = vunpack.c.l.b16 %v24
  %v433 = vunpack.c.h.b16 %v24
  %v434 = vunpack.c.l.b16 %v25
  %v435 = vunpack.c.h.b16 %v25
  %v436 = vunpack.c.l.b16 %v26
  %v437 = vunpack.c.h.b16 %v26
  %v438 = vunpack.c.l.b16 %v27
  %v439 = vunpack.c.h.b16 %v27
  %v440 = vunpack.c.l.b16 %v28
  %v441 = vunpack.c.h.b16 %v28
  %v442 = vunpack.c.l.b16 %v29
  %v443 = vunpack.c.h.b16 %v29
  %v444 = vunpack.c.l.b16 %v30
  %v445 = vunpack.c.h.b16 %v30
  %v446 = vunpack.c.l.b16 %v31
  %v447 = vunpack.c.h.b16 %v31
  %v448 = vunpack.c.l.b16 %v32
  %v449 = vunpack.c.h.b16 %v32
  %v450 = vunpack.c.l.b16 %v33
  %v451 = vunpack.c.h.b16 %v33
  %v452 = vunpack.c.l.b16 %v34
  %v453 = vunpack.c.h.b16 %v34
  %v454 = vunpack.c.l.b16 %v35
  %v455 = vunpack.c.h.b16 %v35
  %v456 = vunpack.c.l.b16 %v36
  %v457 = vunpack.c.h.b16 %v36
  %v458 = vunpack.c.l.b16 %v37
  %v459 = vunpack.c.h.b16 %v37
  %v460 = vunpack.c.l.b16 %v38
  %v461 = vunpack.c.h.b16 %v38
  %v462 = vunpack.c.l.b16 %v39
  %v463 = vunpack.c.h.b16 %v39
  %v464 = vunpack.c.l.b16 %v40
  %v465 = vunpack.c.h.b16 %v40
  %v466 = vunpack.c.l.b16 %v41
  %v467 = vunpack.c.h.b16 %v41
  %v468 = vunpack.c.l.b16 %v42
  %v469 = vunpack.c.h.b16 %v42
  %v470 = vunpack.c.l.b16 %v43
  %v471 = vunpack.c.h.b16 %v43
  %v472 = vunpack.c.l.b16 %v44
  %v473 = vunpack.c.h.b16 %v44
  %v474 = vunpack.c.l.b16 %v45
  %v475 = vunpack.c.h.b16 %v45
  %v476 = vunpack.c.l.b16 %v46
  %v477 = vunpack.c.h.b16 %v46
  %v478 = vunpack.c.l.b16 %v47
  %v479 = vunpack.c.h.b16 %v47
  %v480 = vunpack.c.l.b16 %v48
  %v481 = vunpack.c.h.b16 %v48
  %v482 = vunpack.c.l.b16 %v49
  %v483 = vunpack.c.h.b16 %v49
  %v484 = vunpack.c.l.b16 %v50
  %v485 = vunpack.c.h.b16 %v50
  %v486 = vunpack.c.l.b16 %v51
  %v487 = vunpack.c.h.b16 %v51
  %v488 = vunpack.c.l.b16 %v52
  %v489 = vunpack.c.h.b16 %v52
  %v490 = vunpack.c.l.b16 %v53
  %v491 = vunpack.c.h.b16 %v53
  %v492 = vunpack.c.l.b16 %v54
  %v493 = vunpack.c.h.b16 %v54
  %v494 = vunpack.c.l.b16 %v55
  %v495 = vunpack.c.h.b16 %v55
  %v496 = vunpack.c.l.b16 %v56
  %v497 = vunpack.c.h.b16 %v56
  %v498 = vunpack.c.l.b16 %v57
  %v499 = vunpack.c.h.b16 %v57
  %v500 = vunpack.c.l.b16 %v58
  %v501 = vunpack.c.h.b16 %v58
  %v502 = vunpack.c.l.b16 %v59
  %v503 = vunpack.c.h.b16 %v59
  %v504 = vunpack.c.l.b16 %v60
  %v505 = vunpack.c.h.b16 %v60
  %v506 = vunpack.c.l.b16 %v61
  %v507 = vunpack.c.h.b16 %v61
  %v508 = vunpack.c.l.b16 %v62
  %v509 = vunpack.c.h.b16 %v62
  %v510 = vunpack.c.l.b16 %v63
  %v511 = vunpack.c.h.b16 %v63
  %v512 = vunpack.c.l.b16 %v64
  %v513 = vunpack.c.h.b16 %v64
  %v514 = vunpack.c.l.b16 %v65
  %v515 = vunpack.c.h.b16 %v65
  %v516 = vunpack.c.l.b16 %v66
  %v517 = vunpack.c.h.b16 %v66
  %v518 = vunpack.c.l.b16 %v67
  %v519 = vunpack.c.h.b16 %v67
  %v520 = vunpack.c.l.b16 %v68
  %v521 = vunpack.c.h.b16 %v68
  %v522 = vunpack.c.l.b16 %v69
  %v523 = vunpack.c.h.b16 %v69
  %v524 = vunpack.c.l.b16 %v70
  %v525 = vunpack.c.h.b16 %v70
  %v526 = vunpack.c.l.b16 %v71
  %v527 = vunpack.c.h.b16 %v71
  %v528 = vunpack.c.l.b16 %v72
  %v529 = vunpack.c.h.b16 %v72
  %v530 = vunpack.c.l.b16 %v73
  %v531 = vunpack.c.h.b16 %v73
  %v532 = vunpack.c.l.b16 %v74
  %v533 = vunpack.c.h.b16 %v74
  %v534 = vunpack.c.l.b16 %v75
  %v535 = vunpack.c.h.b16 %v75
  %v536 = vunpack.c.l.b16 %v76
  %v537 = vunpack.c.h.b16 %v76
  %v538 = vunpack.c.l.b16 %v77
  %v539 = vunpack.c.h.b16 %v77
  %v540 = vunpack.c.l.b16 %v78
  %v541 = vunpack.c.h.b16 %v78
  %v542 = vunpack.c.l.b16 %v79
  %v543 = vunpack.c.h.b16 %v79
  %v544 = vunpack.c.l.b16 %v80
  %v545 = vunpack.c.h.b16 %v80
  %v546 = vunpack.c.l.b16 %v81
  %v547 = vunpack.c.h.b16 %v81
  %v548 = vunpack.c.l.b16 %v82
  %v549 = vunpack.c.h.b16 %v82
  %v550 = vunpack.c.l.b16 %v83
  %v551 = vunpack.c.h.b16 %v83
  %v552 = vunpack.c.l.b16 %v84
  %v553 = vunpack.c.h.b16 %v84
  %v554 = vunpack.c.l.b16 %v85
  %v555 = vunpack.c.h.b16 %v85
  %v556 = vunpack.c.l.b16 %v86
  %v557 = vunpack.c.h.b16 %v86
  %v558 = vunpack.c.l.b16 %v87
  %v559 = vunpack.c.h.b16 %v87
  %v560 = vunpack.c.l.b16 %v88
  %v561 = vunpack.c.h.b16 %v88
  %v562 = vunpack.c.l.b16 %v89
  %v563 = vunpack.c.h.b16 %v89
  %v564 = vunpack.c.l.b16 %v90
  %v565 = vunpack.c.h.b16 %v90
  %v566 = vunpack.c.l.b16 %v91
  %v567 = vunpack.c.h.b16 %v91
  %v568 = vunpack.c.l.b16 %v92
  %v569 = vunpack.c.h.b16 %v92
  %v570 = vunpack.c.l.b16 %v93
  %v571 = vunpack.c.h.b16 %v93
  %v572 = vunpack.c.l.b16 %v94
  %v573 = vunpack.c.h.b16 %v94
  %v574 = vunpack.c.l.b16 %v95
  %v575 = vunpack.c.h.b16 %v95
  %v576 = vunpack.c.l.b16 %v96
  %v577 = vunpack.c.h.b16 %v96
  %v578 = vunpack.c.l.b16 %v97
  %v579 = vunpack.c.h.b16 %v97
  %v580 = vunpack.c.l.b16 %v98
  %v581 = vunpack.c.h.b16 %v98
  %v582 = vunpack.c.l.b16 %v99
  %v583 = vunpack.c.h.b16 %v99
  %v584 = vunpack.c.l.b16 %v100
  %v585 = vunpack.c.h.b16 %v100
  %v586 = vunpack.c.l.b16 %v101
  %v587 = vunpack.c.h.b16 %v101
  %v588 = vunpack.c.l.b16 %v102
  %v589 = vunpack.c.h.b16 %v102
  %v590 = vunpack.c.l.b16 %v103
  %v591 = vunpack.c.h.b16 %v103
  %v592 = vunpack.c.l.b16 %v104
  %v593 = vunpack.c.h.b16 %v104
  %v594 = vunpack.c.l.b16 %v105
  %v595 = vunpack.c.h.b16 %v105
  %v596 = vunpack.c.l.b16 %v106
  %v597 = vunpack.c.h.b16 %v106
  %v598 = vunpack.c.l.b16 %v107
  %v599 = vunpack.c.h.b16 %v107
  %v600 = vunpack.c.l.b16 %v108
  %v601 = vunpack.c.h.b16 %v108
  %v602 = vunpack.c.l.b16 %v109
  %v603 = vunpack.c.h.b16 %v109
  %v604 = vunpack.c.l.b16 %v110
  %v605 = vunpack.c.h.b16 %v110
  %v606 = vunpack.c.l.b16 %v111
  %v607 = vunpack.c.h.b16 %v111
  %v608 = vunpack.c.l.b16 %v112
  %v609 = vunpack.c.h.b16 %v112
  %v610 = vunpack.c.l.b16 %v113
  %v611 = vunpack.c.h.b16 %v113
  %v612 = vunpack.c.l.b16 %v114
  %v613 = vunpack.c.h.b16 %v114
  %v614 = vunpack.c.l.b16 %v115
  %v615 = vunpack.c.h.b16 %v115
  %v616 = vunpack.c.l.b16 %v116
  %v617 = vunpack.c.h.b16 %v116
  %v618 = vunpack.c.l.b16 %v117
  %v619 = vunpack.c.h.b16 %v117
  %v620 = vunpack.c.l.b16 %v118
  %v621 = vunpack.c.h.b16 %v118
  %v622 = vunpack.c.l.b16 %v119
  %v623 = vunpack.c.h.b16 %v119
  %v624 = vunpack.c.l.b16 %v120
  %v625 = vunpack.c.h.b16 %v120
  %v626 = vunpack.c.l.b16 %v121
  %v627 = vunpack.c.h.b16 %v121
  %v628 = vunpack.c.l.b16 %v122
  %v629 = vunpack.c.h.b16 %v122
  %v630 = vunpack.c.l.b16 %v123
  %v631 = vunpack.c.h.b16 %v123
  %v632 = vunpack.c.l.b16 %v124
  %v633 = vunpack.c.h.b16 %v124
  %v634 = vunpack.c.l.b16 %v125
  %v635 = vunpack.c.h.b16 %v125
  %v636 = vunpack.c.l.b16 %v126
  %v637 = vunpack.c.h.b16 %v126
  %v638 = vunpack.c.l.b16 %v127
  %v639 = vunpack.c.h.b16 %v127
  %v640 = vunpack.c.l.b16 %v128
  %v641 = vunpack.c.h.b16 %v128
  %v642 = vunpack.c.l.b16 %v129
  %v643 = vunpack.c.h.b16 %v129
  %v644 = vunpack.c.l.b16 %v130
  %v645 = vunpack.c.h.b16 %v130
  %v646 = vunpack.c.l.b16 %v131
  %v647 = vunpack.c.h.b16 %v131
  %v648 = vunpack.c.l.b16 %v132
  %v649 = vunpack.c.h.b16 %v132
  %v650 = vunpack.c.l.b16 %v133
  %v651 = vunpack.c.h.b16 %v133
  %v652 = vunpack.c.l.b16 %v134
  %v653 = vunpack.c.h.b16 %v134
  %v654 = vunpack.c.l.b16 %v135
  %v655 = vunpack.c.h.b16 %v135
  %v656 = vunpack.c.l.b16 %v136
  %v657 = vunpack.c.h.b16 %v136
  %v658 = vunpack.c.l.b16 %v137
  %v659 = vunpack.c.h.b16 %v137
  %v660 = vunpack.c.l.b16 %v138
  %v661 = vunpack.c.h.b16 %v138
  %v662 = vunpack.c.l.b16 %v139
  %v663 = vunpack.c.h.b16 %v139
  %v664 = vpack.c.b16 %v416, %v414
  %v665 = vpack.c.b16 %v417, %v415
  %v666 = vpack.c.b16 %v420, %v418
  %v667 = vpack.c.b16 %v421, %v419
  %v668 = vpack.c.b16 %v424, %v422
  %v669 = vpack.c.b16 %v425, %v423
  %v670 = vpack.c.b16 %v428, %v426
  %v671 = vpack.c.b16 %v429, %v427
  %v672 = vpack.c.b16 %v432, %v430
  %v673 = vpack.c.b16 %v433, %v431
  %v674 = vpack.c.b16 %v436, %v434
  %v675 = vpack.c.b16 %v437, %v435
  %v676 = vpack.c.b16 %v440, %v438
  %v677 = vpack.c.b16 %v441, %v439
  %v678 = vpack.c.b16 %v444, %v442
  %v679 = vpack.c.b16 %v445, %v443
  %v680 = vpack.c.b16 %v448, %v446
  %v681 = vpack.c.b16 %v449, %v447
  %v682 = vpack.c.b16 %v452, %v450
  %v683 = vpack.c.b16 %v453, %v451
  %v684 = vpack.c.b16 %v456, %v454
  %v685 = vpack.c.b16 %v457, %v455
  %v686 = vpack.c.b16 %v460, %v458
  %v687 = vpack.c.b16 %v461, %v459
  %v688 = vpack.c.b16 %v464, %v462
  %v689 = vpack.c.b16 %v465, %v463
  %v690 = vpack.c.b16 %v468, %v466
  %v691 = vpack.c.b16 %v469, %v467
  %v692 = vpack.c.b16 %v472, %v470
  %v693 = vpack.c.b16 %v473, %v471
  %v694 = vpack.c.b16 %v476, %v474
  %v695 = vpack.c.b16 %v477, %v475
  %v696 = vpack.c.b16 %v480, %v478
  %v697 = vpack.c.b16 %v481, %v479
  %v698 = vpack.c.b16 %v484, %v482
  %v699 = vpack.c.b16 %v485, %v483
  %v700 = vpack.c.b16 %v488, %v486
  %v701 = vpack.c.b16 %v489, %v487
  %v702 = vpack.c.b16 %v492, %v490
  %v703 = vpack.c.b16 %v493, %v491
  %v704 = vpack.c.b16 %v496, %v494
  %v705 = vpack.c.b16 %v497, %v495
  %v706 = vpack.c.b16 %v500, %v498
  %v707 = vpack.c.b16 %v501, %v499
  %v708 = vpack.c.b16 %v504, %v502
  %v709 = vpack.c.b16 %v505, %v503
  %v710 = vpack.c.b16 %v508, %v506
  %v711 = vpack.c.b16 %v509, %v507
  %v712 = vpack.c.b16 %v512, %v510
  %v713 = vpack.c.b16 %v513, %v511
  %v714 = vpack.c.b16 %v516, %v514
  %v715 = vpack.c.b16 %v517, %v515
  %v716 = vpack.c.b16 %v520, %v518
  %v717 = vpack.c.b16 %v521, %v519
  %v718 = vpack.c.b16 %v524, %v522
  %v719 = vpack.c.b16 %v525, %v523
  %v720 = vpack.c.b16 %v528, %v526
  %v721 = vpack.c.b16 %v529, %v527
  %v722 = vpack.c.b16 %v532, %v530
  %v723 = vpack.c.b16 %v533, %v531
  %v724 = vpack.c.b16 %v536, %v534
  %v725 = vpack.c.b16 %v537, %v535
  %v726 = vpack.c.b16 %v540, %v538
  %v727 = vpack.c.b16 %v541, %v539
  %v728 = vpack.c.b16 %v544, %v542
  %v729 = vpack.c.b16 %v545, %v543
  %v730 = vpack.c.b16 %v548, %v546
  %v731 = vpack.c.b16 %v549, %v547
  %v732 = vpack.c.b16 %v552, %v550
  %v733 = vpack.c.b16 %v553, %v551
  %v734 = vpack.c.b16 %v556, %v554
  %v735 = vpack.c.b16 %v557, %v555
  %v736 = vpack.c.b16 %v560, %v558
  %v737 = vpack.c.b16 %v561, %v559
  %v738 = vpack.c.b16 %v564, %v562
  %v739 = vpack.c.b16 %v565, %v563
  %v740 = vpack.c.b16 %v568, %v566
  %v741 = vpack.c.b16 %v569, %v567
  %v742 = vpack.c.b16 %v572, %v570
  %v743 = vpack.c.b16 %v573, %v571
  %v744 = vpack.c.b16 %v576, %v574
  %v745 = vpack.c.b16 %v577, %v575
  %v746 = vpack.c.b16 %v580, %v578
  %v747 = vpack.c.b16 %v581, %v579
  %v748 = vpack.c.b16 %v584, %v582
  %v749 = vpack.c.b16 %v585, %v583
  %v750 = vpack.c.b16 %v588, %v586
  %v751 = vpack.c.b16 %v589, %v587
  %v752 = vpack.c.b16 %v592, %v590
  %v753 = vpack.c.b16 %v593, %v591
  %v754 = vpack.c.b16 %v596, %v594
  %v755 = vpack.c.b16 %v597, %v595
  %v756 = vpack.c.b16 %v600, %v598
  %v757 = vpack.c.b16 %v601, %v599
  %v758 = vpack.c.b16 %v604, %v602
  %v759 = vpack.c.b16 %v605, %v603
  %v760 = vpack.c.b16 %v608, %v606
  %v761 = vpack.c.b16 %v609, %v607
  %v762 = vpack.c.b16 %v612, %v610
  %v763 = vpack.c.b16 %v613, %v611
  %v764 = vpack.c.b16 %v616, %v614
  %v765 = vpack.c.b16 %v617, %v615
  %v766 = vpack.c.b16 %v620, %v618
  %v767 = vpack.c.b16 %v621, %v619
  %v768 = vpack.c.b16 %v624, %v622
  %v769 = vpack.c.b16 %v625, %v623
  %v770 = vpack.c.b16 %v628, %v626
  %v771 = vpack.c.b16 %v629, %v627
  %v772 = vpack.c.b16 %v632, %v630
  %v773 = vpack.c.b16 %v633, %v631
  %v774 = vpack.c.b16 %v636, %v634
  %v775 = vpack.c.b16 %v637, %v635
  %v776 = vpack.c.b16 %v640, %v638
  %v777 = vpack.c.b16 %v641, %v639
  %v778 = vpack.c.b16 %v644, %v642
  %v779 = vpack.c.b16 %v645, %v643
  %v780 = vpack.c.b16 %v648, %v646
  %v781 = vpack.c.b16 %v649, %v647
  %v782 = vpack.c.b16 %v652, %v650
  %v783 = vpack.c.b16 %v653, %v651
  %v784 = vpack.c.b16 %v656, %v654
  %v785 = vpack.c.b16 %v657, %v655
  %v786 = vpack.c.b16 %v660, %v658
  %v787 = vpack.c.b16 %v661, %v659
  %v788 = vpack.c.b16 %v662, %v662
  %v789 = vpack.c.b16 %v663, %v663
  %v877 = vunpack.c.l.b16 %v140
  %v878 = vunpack.c.l.b16 %v141
  %v879 = vunpack.c.l.b16 %v142
  %v880 = vunpack.c.l.b16 %v143
  %v881 = vunpack.c.l.b16 %v144
  %v882 = vunpack.c.l.b16 %v145
  %v883 = vunpack.c.l.b16 %v146
  %v884 = vunpack.c.l.b16 %v147
  %v885 = vunpack.c.l.b16 %v148
  %v886 = vunpack.c.l.b16 %v149
  %v887 = vunpack.c.l.b16 %v150
  %v888 = vunpack.c.l.b16 %v151
  %v889 = vunpack.c.l.b16 %v152
  %v890 = vunpack.c.l.b16 %v153
  %v891 = vunpack.c.l.b16 %v154
  %v892 = vunpack.c.l.b16 %v155
  %v893 = vunpack.c.l.b16 %v156
  %v894 = vunpack.c.l.b16 %v157
  %v895 = vunpack.c.l.b16 %v158
  %v896 = vunpack.c.l.b16 %v159
  %v897 = vunpack.c.l.b16 %v160
  %v898 = vunpack.c.l.b16 %v161
  %v899 = vunpack.c.l.b16 %v162
  %v900 = vunpack.c.l.b16 %v163
  %v901 = vpack.c.b16 %v878, %v877
  %v902 = vpack.c.b16 %v880, %v879
  %v903 = vpack.c.b16 %v882, %v881
  %v904 = vpack.c.b16 %v884, %v883
  %v905 = vpack.c.b16 %v886, %v885
  %v906 = vpack.c.b16 %v888, %v887
  %v907 = vpack.c.b16 %v890, %v889
  %v908 = vpack.c.b16 %v892, %v891
  %v909 = vpack.c.b16 %v894, %v893
  %v910 = vpack.c.b16 %v896, %v895
  %v911 = vpack.c.b16 %v898, %v897
  %v912 = vpack.c.b16 %v900, %v899
  %vm925 = vcmask 523264
  %v927 = vsel %vm925, %v665, 0
  %v930 = vsel %vm925, %v667, 0
  %v933 = vsel %vm925, %v669, 0
  %v936 = vsel %vm925, %v671, 0
  %v939 = vsel %vm925, %v673, 0
  %v942 = vsel %vm925, %v675, 0
  %v945 = vsel %vm925, %v677, 0
  %v948 = vsel %vm925, %v679, 0
  %v951 = vsel %vm925, %v681, 0
  %v954 = vsel %vm925, %v683, 0
  %v957 = vsel %vm925, %v685, 0
  %v960 = vsel %vm925, %v687, 0
  %v963 = vsel %vm925, %v689, 0
  %v966 = vsel %vm925, %v691, 0
  %v969 = vsel %vm925, %v693, 0
  %v972 = vsel %vm925, %v695, 0
  %v975 = vsel %vm925, %v697, 0
  %v978 = vsel %vm925, %v699, 0
  %v981 = vsel %vm925, %v701, 0
  %v984 = vsel %vm925, %v703, 0
  %v987 = vsel %vm925, %v705, 0
  %v990 = vsel %vm925, %v707, 0
  %v993 = vsel %vm925, %v709, 0
  %v996 = vsel %vm925, %v711, 0
  %v999 = vsel %vm925, %v713, 0
  %v1002 = vsel %vm925, %v715, 0
  %v1005 = vsel %vm925, %v717, 0
  %v1008 = vsel %vm925, %v719, 0
  %v1011 = vsel %vm925, %v721, 0
  %v1014 = vsel %vm925, %v723, 0
  %v1017 = vsel %vm925, %v725, 0
  %v1020 = vsel %vm925, %v727, 0
  %v1023 = vsel %vm925, %v729, 0
  %v1026 = vsel %vm925, %v731, 0
  %v1029 = vsel %vm925, %v733, 0
  %v1032 = vsel %vm925, %v735, 0
  %v1035 = vsel %vm925, %v737, 0
  %v1038 = vsel %vm925, %v739, 0
  %v1041 = vsel %vm925, %v741, 0
  %v1044 = vsel %vm925, %v743, 0
  %v1047 = vsel %vm925, %v745, 0
  %v1050 = vsel %vm925, %v747, 0
  %v1053 = vsel %vm925, %v749, 0
  %v1056 = vsel %vm925, %v751, 0
  %v1059 = vsel %vm925, %v753, 0
  %v1062 = vsel %vm925, %v755, 0
  %v1065 = vsel %vm925, %v757, 0
  %v1068 = vsel %vm925, %v759, 0
  %v1071 = vsel %vm925, %v761, 0
  %v1074 = vsel %vm925, %v763, 0
  %v1077 = vsel %vm925, %v765, 0
  %v1080 = vsel %vm925, %v767, 0
  %v1083 = vsel %vm925, %v769, 0
  %v1086 = vsel %vm925, %v771, 0
  %v1089 = vsel %vm925, %v773, 0
  %v1092 = vsel %vm925, %v775, 0
  %v1095 = vsel %vm925, %v777, 0
  %v1098 = vsel %vm925, %v779, 0
  %v1101 = vsel %vm925, %v781, 0
  %v1104 = vsel %vm925, %v783, 0
  %v1107 = vsel %vm925, %v785, 0
  %v1110 = vsel %vm925, %v787, 0
  %v1113 = vsel %vm925, %v789, 0
  %1115 = vmatpush.bf16.msra.mxu0 %v908
  %1116 = vmatpush.bf16.msra.mxu0 %v907
  %1117 = vmatpush.bf16.msra.mxu0 %v906
  %1118 = vmatpush.bf16.msra.mxu0 %v905
  %1119 = vmatpush.bf16.msra.mxu0 %v904
  %1120 = vmatpush.bf16.msra.mxu0 %v903
  %1121 = vmatpush.bf16.msra.mxu0 %v902
  %1122 = vmatpush.bf16.msra.mxu0 %v901
  %1123 = vmatmul.bf16.gmra.mxu0 %v664
  %v1124 = vpop.f32.mrf.mxu0
  %v1125 = vadd.f32 %v164, %v1124
  %v1126 = vpop.f32.mrf.mxu0
  %v1127 = vadd.f32 %v165, %v1126
  %1128 = vmatmul.bf16.gmra.mxu0 %v666
  %v1129 = vpop.f32.mrf.mxu0
  %v1130 = vadd.f32 %v166, %v1129
  %v1131 = vpop.f32.mrf.mxu0
  %v1132 = vadd.f32 %v167, %v1131
  %1133 = vmatmul.bf16.gmra.mxu0 %v668
  %v1134 = vpop.f32.mrf.mxu0
  %v1135 = vadd.f32 %v168, %v1134
  %v1136 = vpop.f32.mrf.mxu0
  %v1137 = vadd.f32 %v169, %v1136
  %1138 = vmatmul.bf16.gmra.mxu0 %v670
  %v1139 = vpop.f32.mrf.mxu0
  %v1140 = vadd.f32 %v170, %v1139
  %v1141 = vpop.f32.mrf.mxu0
  %v1142 = vadd.f32 %v171, %v1141
  %1143 = vmatmul.bf16.gmra.mxu0 %v672
  %v1144 = vpop.f32.mrf.mxu0
  %v1145 = vadd.f32 %v172, %v1144
  %v1146 = vpop.f32.mrf.mxu0
  %v1147 = vadd.f32 %v173, %v1146
  %1148 = vmatmul.bf16.gmra.mxu0 %v674
  %v1149 = vpop.f32.mrf.mxu0
  %v1150 = vadd.f32 %v174, %v1149
  %v1151 = vpop.f32.mrf.mxu0
  %v1152 = vadd.f32 %v175, %v1151
  %1153 = vmatmul.bf16.gmra.mxu0 %v676
  %v1154 = vpop.f32.mrf.mxu0
  %v1155 = vadd.f32 %v176, %v1154
  %v1156 = vpop.f32.mrf.mxu0
  %v1157 = vadd.f32 %v177, %v1156
  %1158 = vmatmul.bf16.gmra.mxu0 %v678
  %v1159 = vpop.f32.mrf.mxu0
  %v1160 = vadd.f32 %v178, %v1159
  %v1161 = vpop.f32.mrf.mxu0
  %v1162 = vadd.f32 %v179, %v1161
  %1163 = vmatmul.bf16.gmra.mxu0 %v680
  %v1164 = vpop.f32.mrf.mxu0
  %v1165 = vadd.f32 %v180, %v1164
  %v1166 = vpop.f32.mrf.mxu0
  %v1167 = vadd.f32 %v181, %v1166
  %1168 = vmatmul.bf16.gmra.mxu0 %v682
  %v1169 = vpop.f32.mrf.mxu0
  %v1170 = vadd.f32 %v182, %v1169
  %v1171 = vpop.f32.mrf.mxu0
  %v1172 = vadd.f32 %v183, %v1171
  %1173 = vmatmul.bf16.gmra.mxu0 %v684
  %v1174 = vpop.f32.mrf.mxu0
  %v1175 = vadd.f32 %v184, %v1174
  %v1176 = vpop.f32.mrf.mxu0
  %v1177 = vadd.f32 %v185, %v1176
  %1178 = vmatmul.bf16.gmra.mxu0 %v686
  %v1179 = vpop.f32.mrf.mxu0
  %v1180 = vadd.f32 %v186, %v1179
  %v1181 = vpop.f32.mrf.mxu0
  %v1182 = vadd.f32 %v187, %v1181
  %1183 = vmatmul.bf16.gmra.mxu0 %v688
  %v1184 = vpop.f32.mrf.mxu0
  %v1185 = vadd.f32 %v188, %v1184
  %v1186 = vpop.f32.mrf.mxu0
  %v1187 = vadd.f32 %v189, %v1186
  %1188 = vmatmul.bf16.gmra.mxu0 %v690
  %v1189 = vpop.f32.mrf.mxu0
  %v1190 = vadd.f32 %v190, %v1189
  %v1191 = vpop.f32.mrf.mxu0
  %v1192 = vadd.f32 %v191, %v1191
  %1193 = vmatmul.bf16.gmra.mxu0 %v692
  %v1194 = vpop.f32.mrf.mxu0
  %v1195 = vadd.f32 %v192, %v1194
  %v1196 = vpop.f32.mrf.mxu0
  %v1197 = vadd.f32 %v193, %v1196
  %1198 = vmatmul.bf16.gmra.mxu0 %v694
  %v1199 = vpop.f32.mrf.mxu0
  %v1200 = vadd.f32 %v194, %v1199
  %v1201 = vpop.f32.mrf.mxu0
  %v1202 = vadd.f32 %v195, %v1201
  %1203 = vmatmul.bf16.gmra.mxu0 %v696
  %v1204 = vpop.f32.mrf.mxu0
  %v1205 = vadd.f32 %v196, %v1204
  %v1206 = vpop.f32.mrf.mxu0
  %v1207 = vadd.f32 %v197, %v1206
  %1208 = vmatmul.bf16.gmra.mxu0 %v698
  %v1209 = vpop.f32.mrf.mxu0
  %v1210 = vadd.f32 %v198, %v1209
  %v1211 = vpop.f32.mrf.mxu0
  %v1212 = vadd.f32 %v199, %v1211
  %1213 = vmatmul.bf16.gmra.mxu0 %v700
  %v1214 = vpop.f32.mrf.mxu0
  %v1215 = vadd.f32 %v200, %v1214
  %v1216 = vpop.f32.mrf.mxu0
  %v1217 = vadd.f32 %v201, %v1216
  %1218 = vmatmul.bf16.gmra.mxu0 %v702
  %v1219 = vpop.f32.mrf.mxu0
  %v1220 = vadd.f32 %v202, %v1219
  %v1221 = vpop.f32.mrf.mxu0
  %v1222 = vadd.f32 %v203, %v1221
  %1223 = vmatmul.bf16.gmra.mxu0 %v704
  %v1224 = vpop.f32.mrf.mxu0
  %v1225 = vadd.f32 %v204, %v1224
  %v1226 = vpop.f32.mrf.mxu0
  %v1227 = vadd.f32 %v205, %v1226
  %1228 = vmatmul.bf16.gmra.mxu0 %v706
  %v1229 = vpop.f32.mrf.mxu0
  %v1230 = vadd.f32 %v206, %v1229
  %v1231 = vpop.f32.mrf.mxu0
  %v1232 = vadd.f32 %v207, %v1231
  %1233 = vmatmul.bf16.gmra.mxu0 %v708
  %v1234 = vpop.f32.mrf.mxu0
  %v1235 = vadd.f32 %v208, %v1234
  %v1236 = vpop.f32.mrf.mxu0
  %v1237 = vadd.f32 %v209, %v1236
  %1238 = vmatmul.bf16.gmra.mxu0 %v710
  %v1239 = vpop.f32.mrf.mxu0
  %v1240 = vadd.f32 %v210, %v1239
  %v1241 = vpop.f32.mrf.mxu0
  %v1242 = vadd.f32 %v211, %v1241
  %1243 = vmatmul.bf16.gmra.mxu0 %v712
  %v1244 = vpop.f32.mrf.mxu0
  %v1245 = vadd.f32 %v212, %v1244
  %v1246 = vpop.f32.mrf.mxu0
  %v1247 = vadd.f32 %v213, %v1246
  %1248 = vmatmul.bf16.gmra.mxu0 %v714
  %v1249 = vpop.f32.mrf.mxu0
  %v1250 = vadd.f32 %v214, %v1249
  %v1251 = vpop.f32.mrf.mxu0
  %v1252 = vadd.f32 %v215, %v1251
  %1253 = vmatmul.bf16.gmra.mxu0 %v716
  %v1254 = vpop.f32.mrf.mxu0
  %v1255 = vadd.f32 %v216, %v1254
  %v1256 = vpop.f32.mrf.mxu0
  %v1257 = vadd.f32 %v217, %v1256
  %1258 = vmatmul.bf16.gmra.mxu0 %v718
  %v1259 = vpop.f32.mrf.mxu0
  %v1260 = vadd.f32 %v218, %v1259
  %v1261 = vpop.f32.mrf.mxu0
  %v1262 = vadd.f32 %v219, %v1261
  %1263 = vmatmul.bf16.gmra.mxu0 %v720
  %v1264 = vpop.f32.mrf.mxu0
  %v1265 = vadd.f32 %v220, %v1264
  %v1266 = vpop.f32.mrf.mxu0
  %v1267 = vadd.f32 %v221, %v1266
  %1268 = vmatmul.bf16.gmra.mxu0 %v722
  %v1269 = vpop.f32.mrf.mxu0
  %v1270 = vadd.f32 %v222, %v1269
  %v1271 = vpop.f32.mrf.mxu0
  %v1272 = vadd.f32 %v223, %v1271
  %1273 = vmatmul.bf16.gmra.mxu0 %v724
  %v1274 = vpop.f32.mrf.mxu0
  %v1275 = vadd.f32 %v224, %v1274
  %v1276 = vpop.f32.mrf.mxu0
  %v1277 = vadd.f32 %v225, %v1276
  %1278 = vmatmul.bf16.gmra.mxu0 %v726
  %v1279 = vpop.f32.mrf.mxu0
  %v1280 = vadd.f32 %v226, %v1279
  %v1281 = vpop.f32.mrf.mxu0
  %v1282 = vadd.f32 %v227, %v1281
  %1283 = vmatmul.bf16.gmra.mxu0 %v728
  %v1284 = vpop.f32.mrf.mxu0
  %v1285 = vadd.f32 %v228, %v1284
  %v1286 = vpop.f32.mrf.mxu0
  %v1287 = vadd.f32 %v229, %v1286
  %1288 = vmatmul.bf16.gmra.mxu0 %v730
  %v1289 = vpop.f32.mrf.mxu0
  %v1290 = vadd.f32 %v230, %v1289
  %v1291 = vpop.f32.mrf.mxu0
  %v1292 = vadd.f32 %v231, %v1291
  %1293 = vmatmul.bf16.gmra.mxu0 %v732
  %v1294 = vpop.f32.mrf.mxu0
  %v1295 = vadd.f32 %v232, %v1294
  %v1296 = vpop.f32.mrf.mxu0
  %v1297 = vadd.f32 %v233, %v1296
  %1298 = vmatmul.bf16.gmra.mxu0 %v734
  %v1299 = vpop.f32.mrf.mxu0
  %v1300 = vadd.f32 %v234, %v1299
  %v1301 = vpop.f32.mrf.mxu0
  %v1302 = vadd.f32 %v235, %v1301
  %1303 = vmatmul.bf16.gmra.mxu0 %v736
  %v1304 = vpop.f32.mrf.mxu0
  %v1305 = vadd.f32 %v236, %v1304
  %v1306 = vpop.f32.mrf.mxu0
  %v1307 = vadd.f32 %v237, %v1306
  %1308 = vmatmul.bf16.gmra.mxu0 %v738
  %v1309 = vpop.f32.mrf.mxu0
  %v1310 = vadd.f32 %v238, %v1309
  %v1311 = vpop.f32.mrf.mxu0
  %v1312 = vadd.f32 %v239, %v1311
  %1313 = vmatmul.bf16.gmra.mxu0 %v740
  %v1314 = vpop.f32.mrf.mxu0
  %v1315 = vadd.f32 %v240, %v1314
  %v1316 = vpop.f32.mrf.mxu0
  %v1317 = vadd.f32 %v241, %v1316
  %1318 = vmatmul.bf16.gmra.mxu0 %v742
  %v1319 = vpop.f32.mrf.mxu0
  %v1320 = vadd.f32 %v242, %v1319
  %v1321 = vpop.f32.mrf.mxu0
  %v1322 = vadd.f32 %v243, %v1321
  %1323 = vmatmul.bf16.gmra.mxu0 %v744
  %v1324 = vpop.f32.mrf.mxu0
  %v1325 = vadd.f32 %v244, %v1324
  %v1326 = vpop.f32.mrf.mxu0
  %v1327 = vadd.f32 %v245, %v1326
  %1328 = vmatmul.bf16.gmra.mxu0 %v746
  %v1329 = vpop.f32.mrf.mxu0
  %v1330 = vadd.f32 %v246, %v1329
  %v1331 = vpop.f32.mrf.mxu0
  %v1332 = vadd.f32 %v247, %v1331
  %1333 = vmatmul.bf16.gmra.mxu0 %v748
  %v1334 = vpop.f32.mrf.mxu0
  %v1335 = vadd.f32 %v248, %v1334
  %v1336 = vpop.f32.mrf.mxu0
  %v1337 = vadd.f32 %v249, %v1336
  %1338 = vmatmul.bf16.gmra.mxu0 %v750
  %v1339 = vpop.f32.mrf.mxu0
  %v1340 = vadd.f32 %v250, %v1339
  %v1341 = vpop.f32.mrf.mxu0
  %v1342 = vadd.f32 %v251, %v1341
  %1343 = vmatmul.bf16.gmra.mxu0 %v752
  %v1344 = vpop.f32.mrf.mxu0
  %v1345 = vadd.f32 %v252, %v1344
  %v1346 = vpop.f32.mrf.mxu0
  %v1347 = vadd.f32 %v253, %v1346
  %1348 = vmatmul.bf16.gmra.mxu0 %v754
  %v1349 = vpop.f32.mrf.mxu0
  %v1350 = vadd.f32 %v254, %v1349
  %v1351 = vpop.f32.mrf.mxu0
  %v1352 = vadd.f32 %v255, %v1351
  %1353 = vmatmul.bf16.gmra.mxu0 %v756
  %v1354 = vpop.f32.mrf.mxu0
  %v1355 = vadd.f32 %v256, %v1354
  %v1356 = vpop.f32.mrf.mxu0
  %v1357 = vadd.f32 %v257, %v1356
  %1358 = vmatmul.bf16.gmra.mxu0 %v758
  %v1359 = vpop.f32.mrf.mxu0
  %v1360 = vadd.f32 %v258, %v1359
  %v1361 = vpop.f32.mrf.mxu0
  %v1362 = vadd.f32 %v259, %v1361
  %1363 = vmatmul.bf16.gmra.mxu0 %v760
  %v1364 = vpop.f32.mrf.mxu0
  %v1365 = vadd.f32 %v260, %v1364
  %v1366 = vpop.f32.mrf.mxu0
  %v1367 = vadd.f32 %v261, %v1366
  %1368 = vmatmul.bf16.gmra.mxu0 %v762
  %v1369 = vpop.f32.mrf.mxu0
  %v1370 = vadd.f32 %v262, %v1369
  %v1371 = vpop.f32.mrf.mxu0
  %v1372 = vadd.f32 %v263, %v1371
  %1373 = vmatmul.bf16.gmra.mxu0 %v764
  %v1374 = vpop.f32.mrf.mxu0
  %v1375 = vadd.f32 %v264, %v1374
  %v1376 = vpop.f32.mrf.mxu0
  %v1377 = vadd.f32 %v265, %v1376
  %1378 = vmatmul.bf16.gmra.mxu0 %v766
  %v1379 = vpop.f32.mrf.mxu0
  %v1380 = vadd.f32 %v266, %v1379
  %v1381 = vpop.f32.mrf.mxu0
  %v1382 = vadd.f32 %v267, %v1381
  %1383 = vmatmul.bf16.gmra.mxu0 %v768
  %v1384 = vpop.f32.mrf.mxu0
  %v1385 = vadd.f32 %v268, %v1384
  %v1386 = vpop.f32.mrf.mxu0
  %v1387 = vadd.f32 %v269, %v1386
  %1388 = vmatmul.bf16.gmra.mxu0 %v770
  %v1389 = vpop.f32.mrf.mxu0
  %v1390 = vadd.f32 %v270, %v1389
  %v1391 = vpop.f32.mrf.mxu0
  %v1392 = vadd.f32 %v271, %v1391
  %1393 = vmatmul.bf16.gmra.mxu0 %v772
  %v1394 = vpop.f32.mrf.mxu0
  %v1395 = vadd.f32 %v272, %v1394
  %v1396 = vpop.f32.mrf.mxu0
  %v1397 = vadd.f32 %v273, %v1396
  %1398 = vmatmul.bf16.gmra.mxu0 %v774
  %v1399 = vpop.f32.mrf.mxu0
  %v1400 = vadd.f32 %v274, %v1399
  %v1401 = vpop.f32.mrf.mxu0
  %v1402 = vadd.f32 %v275, %v1401
  %1403 = vmatmul.bf16.gmra.mxu0 %v776
  %v1404 = vpop.f32.mrf.mxu0
  %v1405 = vadd.f32 %v276, %v1404
  %v1406 = vpop.f32.mrf.mxu0
  %v1407 = vadd.f32 %v277, %v1406
  %1408 = vmatmul.bf16.gmra.mxu0 %v778
  %v1409 = vpop.f32.mrf.mxu0
  %v1410 = vadd.f32 %v278, %v1409
  %v1411 = vpop.f32.mrf.mxu0
  %v1412 = vadd.f32 %v279, %v1411
  %1413 = vmatmul.bf16.gmra.mxu0 %v780
  %v1414 = vpop.f32.mrf.mxu0
  %v1415 = vadd.f32 %v280, %v1414
  %v1416 = vpop.f32.mrf.mxu0
  %v1417 = vadd.f32 %v281, %v1416
  %1418 = vmatmul.bf16.gmra.mxu0 %v782
  %v1419 = vpop.f32.mrf.mxu0
  %v1420 = vadd.f32 %v282, %v1419
  %v1421 = vpop.f32.mrf.mxu0
  %v1422 = vadd.f32 %v283, %v1421
  %1423 = vmatmul.bf16.gmra.mxu0 %v784
  %v1424 = vpop.f32.mrf.mxu0
  %v1425 = vadd.f32 %v284, %v1424
  %v1426 = vpop.f32.mrf.mxu0
  %v1427 = vadd.f32 %v285, %v1426
  %1428 = vmatmul.bf16.gmra.mxu0 %v786
  %v1429 = vpop.f32.mrf.mxu0
  %v1430 = vadd.f32 %v286, %v1429
  %v1431 = vpop.f32.mrf.mxu0
  %v1432 = vadd.f32 %v287, %v1431
  %1433 = vmatmul.bf16.gmra.mxu0 %v788
  %v1434 = vpop.f32.mrf.mxu0
  %v1435 = vadd.f32 %v288, %v1434
  %v1436 = vpop.f32.mrf.mxu0
  %1437 = vdwg.mxu0
  %1438 = vmatpush.bf16.msra.mxu0 0
  %1439 = vmatpush.bf16.msra.mxu0 0
  %1440 = vmatpush.bf16.msra.mxu0 0
  %1441 = vmatpush.bf16.msra.mxu0 0
  %1442 = vmatpush.bf16.msra.mxu0 %v912
  %1443 = vmatpush.bf16.msra.mxu0 %v911
  %1444 = vmatpush.bf16.msra.mxu0 %v910
  %1445 = vmatpush.bf16.msra.mxu0 %v909
  %1446 = vmatmul.bf16.gmra.mxu0 %v927
  %v1447 = vpop.f32.mrf.mxu0
  %v1448 = vadd.f32 %v1125, %v1447
  %v1449 = vpop.f32.mrf.mxu0
  %v1450 = vadd.f32 %v1127, %v1449
  %1451 = vmatmul.bf16.gmra.mxu0 %v930
  %v1452 = vpop.f32.mrf.mxu0
  %v1453 = vadd.f32 %v1130, %v1452
  %v1454 = vpop.f32.mrf.mxu0
  %v1455 = vadd.f32 %v1132, %v1454
  %1456 = vmatmul.bf16.gmra.mxu0 %v933
  %v1457 = vpop.f32.mrf.mxu0
  %v1458 = vadd.f32 %v1135, %v1457
  %v1459 = vpop.f32.mrf.mxu0
  %v1460 = vadd.f32 %v1137, %v1459
  %1461 = vmatmul.bf16.gmra.mxu0 %v936
  %v1462 = vpop.f32.mrf.mxu0
  %v1463 = vadd.f32 %v1140, %v1462
  %v1464 = vpop.f32.mrf.mxu0
  %v1465 = vadd.f32 %v1142, %v1464
  %1466 = vmatmul.bf16.gmra.mxu0 %v939
  %v1467 = vpop.f32.mrf.mxu0
  %v1468 = vadd.f32 %v1145, %v1467
  %v1469 = vpop.f32.mrf.mxu0
  %v1470 = vadd.f32 %v1147, %v1469
  %1471 = vmatmul.bf16.gmra.mxu0 %v942
  %v1472 = vpop.f32.mrf.mxu0
  %v1473 = vadd.f32 %v1150, %v1472
  %v1474 = vpop.f32.mrf.mxu0
  %v1475 = vadd.f32 %v1152, %v1474
  %1476 = vmatmul.bf16.gmra.mxu0 %v945
  %v1477 = vpop.f32.mrf.mxu0
  %v1478 = vadd.f32 %v1155, %v1477
  %v1479 = vpop.f32.mrf.mxu0
  %v1480 = vadd.f32 %v1157, %v1479
  %1481 = vmatmul.bf16.gmra.mxu0 %v948
  %v1482 = vpop.f32.mrf.mxu0
  %v1483 = vadd.f32 %v1160, %v1482
  %v1484 = vpop.f32.mrf.mxu0
  %v1485 = vadd.f32 %v1162, %v1484
  %1486 = vmatmul.bf16.gmra.mxu0 %v951
  %v1487 = vpop.f32.mrf.mxu0
  %v1488 = vadd.f32 %v1165, %v1487
  %v1489 = vpop.f32.mrf.mxu0
  %v1490 = vadd.f32 %v1167, %v1489
  %1491 = vmatmul.bf16.gmra.mxu0 %v954
  %v1492 = vpop.f32.mrf.mxu0
  %v1493 = vadd.f32 %v1170, %v1492
  %v1494 = vpop.f32.mrf.mxu0
  %v1495 = vadd.f32 %v1172, %v1494
  %1496 = vmatmul.bf16.gmra.mxu0 %v957
  %v1497 = vpop.f32.mrf.mxu0
  %v1498 = vadd.f32 %v1175, %v1497
  %v1499 = vpop.f32.mrf.mxu0
  %v1500 = vadd.f32 %v1177, %v1499
  %1501 = vmatmul.bf16.gmra.mxu0 %v960
  %v1502 = vpop.f32.mrf.mxu0
  %v1503 = vadd.f32 %v1180, %v1502
  %v1504 = vpop.f32.mrf.mxu0
  %v1505 = vadd.f32 %v1182, %v1504
  %1506 = vmatmul.bf16.gmra.mxu0 %v963
  %v1507 = vpop.f32.mrf.mxu0
  %v1508 = vadd.f32 %v1185, %v1507
  %v1509 = vpop.f32.mrf.mxu0
  %v1510 = vadd.f32 %v1187, %v1509
  %1511 = vmatmul.bf16.gmra.mxu0 %v966
  %v1512 = vpop.f32.mrf.mxu0
  %v1513 = vadd.f32 %v1190, %v1512
  %v1514 = vpop.f32.mrf.mxu0
  %v1515 = vadd.f32 %v1192, %v1514
  %1516 = vmatmul.bf16.gmra.mxu0 %v969
  %v1517 = vpop.f32.mrf.mxu0
  %v1518 = vadd.f32 %v1195, %v1517
  %v1519 = vpop.f32.mrf.mxu0
  %v1520 = vadd.f32 %v1197, %v1519
  %1521 = vmatmul.bf16.gmra.mxu0 %v972
  %v1522 = vpop.f32.mrf.mxu0
  %v1523 = vadd.f32 %v1200, %v1522
  %v1524 = vpop.f32.mrf.mxu0
  %v1525 = vadd.f32 %v1202, %v1524
  %1526 = vmatmul.bf16.gmra.mxu0 %v975
  %v1527 = vpop.f32.mrf.mxu0
  %v1528 = vadd.f32 %v1205, %v1527
  %v1529 = vpop.f32.mrf.mxu0
  %v1530 = vadd.f32 %v1207, %v1529
  %1531 = vmatmul.bf16.gmra.mxu0 %v978
  %v1532 = vpop.f32.mrf.mxu0
  %v1533 = vadd.f32 %v1210, %v1532
  %v1534 = vpop.f32.mrf.mxu0
  %v1535 = vadd.f32 %v1212, %v1534
  %1536 = vmatmul.bf16.gmra.mxu0 %v981
  %v1537 = vpop.f32.mrf.mxu0
  %v1538 = vadd.f32 %v1215, %v1537
  %v1539 = vpop.f32.mrf.mxu0
  %v1540 = vadd.f32 %v1217, %v1539
  %1541 = vmatmul.bf16.gmra.mxu0 %v984
  %v1542 = vpop.f32.mrf.mxu0
  %v1543 = vadd.f32 %v1220, %v1542
  %v1544 = vpop.f32.mrf.mxu0
  %v1545 = vadd.f32 %v1222, %v1544
  %1546 = vmatmul.bf16.gmra.mxu0 %v987
  %v1547 = vpop.f32.mrf.mxu0
  %v1548 = vadd.f32 %v1225, %v1547
  %v1549 = vpop.f32.mrf.mxu0
  %v1550 = vadd.f32 %v1227, %v1549
  %1551 = vmatmul.bf16.gmra.mxu0 %v990
  %v1552 = vpop.f32.mrf.mxu0
  %v1553 = vadd.f32 %v1230, %v1552
  %v1554 = vpop.f32.mrf.mxu0
  %v1555 = vadd.f32 %v1232, %v1554
  %1556 = vmatmul.bf16.gmra.mxu0 %v993
  %v1557 = vpop.f32.mrf.mxu0
  %v1558 = vadd.f32 %v1235, %v1557
  %v1559 = vpop.f32.mrf.mxu0
  %v1560 = vadd.f32 %v1237, %v1559
  %1561 = vmatmul.bf16.gmra.mxu0 %v996
  %v1562 = vpop.f32.mrf.mxu0
  %v1563 = vadd.f32 %v1240, %v1562
  %v1564 = vpop.f32.mrf.mxu0
  %v1565 = vadd.f32 %v1242, %v1564
  %1566 = vmatmul.bf16.gmra.mxu0 %v999
  %v1567 = vpop.f32.mrf.mxu0
  %v1568 = vadd.f32 %v1245, %v1567
  %v1569 = vpop.f32.mrf.mxu0
  %v1570 = vadd.f32 %v1247, %v1569
  %1571 = vmatmul.bf16.gmra.mxu0 %v1002
  %v1572 = vpop.f32.mrf.mxu0
  %v1573 = vadd.f32 %v1250, %v1572
  %v1574 = vpop.f32.mrf.mxu0
  %v1575 = vadd.f32 %v1252, %v1574
  %1576 = vmatmul.bf16.gmra.mxu0 %v1005
  %v1577 = vpop.f32.mrf.mxu0
  %v1578 = vadd.f32 %v1255, %v1577
  %v1579 = vpop.f32.mrf.mxu0
  %v1580 = vadd.f32 %v1257, %v1579
  %1581 = vmatmul.bf16.gmra.mxu0 %v1008
  %v1582 = vpop.f32.mrf.mxu0
  %v1583 = vadd.f32 %v1260, %v1582
  %v1584 = vpop.f32.mrf.mxu0
  %v1585 = vadd.f32 %v1262, %v1584
  %1586 = vmatmul.bf16.gmra.mxu0 %v1011
  %v1587 = vpop.f32.mrf.mxu0
  %v1588 = vadd.f32 %v1265, %v1587
  %v1589 = vpop.f32.mrf.mxu0
  %v1590 = vadd.f32 %v1267, %v1589
  %1591 = vmatmul.bf16.gmra.mxu0 %v1014
  %v1592 = vpop.f32.mrf.mxu0
  %v1593 = vadd.f32 %v1270, %v1592
  %v1594 = vpop.f32.mrf.mxu0
  %v1595 = vadd.f32 %v1272, %v1594
  %1596 = vmatmul.bf16.gmra.mxu0 %v1017
  %v1597 = vpop.f32.mrf.mxu0
  %v1598 = vadd.f32 %v1275, %v1597
  %v1599 = vpop.f32.mrf.mxu0
  %v1600 = vadd.f32 %v1277, %v1599
  %1601 = vmatmul.bf16.gmra.mxu0 %v1020
  %v1602 = vpop.f32.mrf.mxu0
  %v1603 = vadd.f32 %v1280, %v1602
  %v1604 = vpop.f32.mrf.mxu0
  %v1605 = vadd.f32 %v1282, %v1604
  %1606 = vmatmul.bf16.gmra.mxu0 %v1023
  %v1607 = vpop.f32.mrf.mxu0
  %v1608 = vadd.f32 %v1285, %v1607
  %v1609 = vpop.f32.mrf.mxu0
  %v1610 = vadd.f32 %v1287, %v1609
  %1611 = vmatmul.bf16.gmra.mxu0 %v1026
  %v1612 = vpop.f32.mrf.mxu0
  %v1613 = vadd.f32 %v1290, %v1612
  %v1614 = vpop.f32.mrf.mxu0
  %v1615 = vadd.f32 %v1292, %v1614
  %1616 = vmatmul.bf16.gmra.mxu0 %v1029
  %v1617 = vpop.f32.mrf.mxu0
  %v1618 = vadd.f32 %v1295, %v1617
  %v1619 = vpop.f32.mrf.mxu0
  %v1620 = vadd.f32 %v1297, %v1619
  %1621 = vmatmul.bf16.gmra.mxu0 %v1032
  %v1622 = vpop.f32.mrf.mxu0
  %v1623 = vadd.f32 %v1300, %v1622
  %v1624 = vpop.f32.mrf.mxu0
  %v1625 = vadd.f32 %v1302, %v1624
  %1626 = vmatmul.bf16.gmra.mxu0 %v1035
  %v1627 = vpop.f32.mrf.mxu0
  %v1628 = vadd.f32 %v1305, %v1627
  %v1629 = vpop.f32.mrf.mxu0
  %v1630 = vadd.f32 %v1307, %v1629
  %1631 = vmatmul.bf16.gmra.mxu0 %v1038
  %v1632 = vpop.f32.mrf.mxu0
  %v1633 = vadd.f32 %v1310, %v1632
  %v1634 = vpop.f32.mrf.mxu0
  %v1635 = vadd.f32 %v1312, %v1634
  %1636 = vmatmul.bf16.gmra.mxu0 %v1041
  %v1637 = vpop.f32.mrf.mxu0
  %v1638 = vadd.f32 %v1315, %v1637
  %v1639 = vpop.f32.mrf.mxu0
  %v1640 = vadd.f32 %v1317, %v1639
  %1641 = vmatmul.bf16.gmra.mxu0 %v1044
  %v1642 = vpop.f32.mrf.mxu0
  %v1643 = vadd.f32 %v1320, %v1642
  %v1644 = vpop.f32.mrf.mxu0
  %v1645 = vadd.f32 %v1322, %v1644
  %1646 = vmatmul.bf16.gmra.mxu0 %v1047
  %v1647 = vpop.f32.mrf.mxu0
  %v1648 = vadd.f32 %v1325, %v1647
  %v1649 = vpop.f32.mrf.mxu0
  %v1650 = vadd.f32 %v1327, %v1649
  %1651 = vmatmul.bf16.gmra.mxu0 %v1050
  %v1652 = vpop.f32.mrf.mxu0
  %v1653 = vadd.f32 %v1330, %v1652
  %v1654 = vpop.f32.mrf.mxu0
  %v1655 = vadd.f32 %v1332, %v1654
  %1656 = vmatmul.bf16.gmra.mxu0 %v1053
  %v1657 = vpop.f32.mrf.mxu0
  %v1658 = vadd.f32 %v1335, %v1657
  %v1659 = vpop.f32.mrf.mxu0
  %v1660 = vadd.f32 %v1337, %v1659
  %1661 = vmatmul.bf16.gmra.mxu0 %v1056
  %v1662 = vpop.f32.mrf.mxu0
  %v1663 = vadd.f32 %v1340, %v1662
  %v1664 = vpop.f32.mrf.mxu0
  %v1665 = vadd.f32 %v1342, %v1664
  %1666 = vmatmul.bf16.gmra.mxu0 %v1059
  %v1667 = vpop.f32.mrf.mxu0
  %v1668 = vadd.f32 %v1345, %v1667
  %v1669 = vpop.f32.mrf.mxu0
  %v1670 = vadd.f32 %v1347, %v1669
  %1671 = vmatmul.bf16.gmra.mxu0 %v1062
  %v1672 = vpop.f32.mrf.mxu0
  %v1673 = vadd.f32 %v1350, %v1672
  %v1674 = vpop.f32.mrf.mxu0
  %v1675 = vadd.f32 %v1352, %v1674
  %1676 = vmatmul.bf16.gmra.mxu0 %v1065
  %v1677 = vpop.f32.mrf.mxu0
  %v1678 = vadd.f32 %v1355, %v1677
  %v1679 = vpop.f32.mrf.mxu0
  %v1680 = vadd.f32 %v1357, %v1679
  %1681 = vmatmul.bf16.gmra.mxu0 %v1068
  %v1682 = vpop.f32.mrf.mxu0
  %v1683 = vadd.f32 %v1360, %v1682
  %v1684 = vpop.f32.mrf.mxu0
  %v1685 = vadd.f32 %v1362, %v1684
  %1686 = vmatmul.bf16.gmra.mxu0 %v1071
  %v1687 = vpop.f32.mrf.mxu0
  %v1688 = vadd.f32 %v1365, %v1687
  %v1689 = vpop.f32.mrf.mxu0
  %v1690 = vadd.f32 %v1367, %v1689
  %1691 = vmatmul.bf16.gmra.mxu0 %v1074
  %v1692 = vpop.f32.mrf.mxu0
  %v1693 = vadd.f32 %v1370, %v1692
  %v1694 = vpop.f32.mrf.mxu0
  %v1695 = vadd.f32 %v1372, %v1694
  %1696 = vmatmul.bf16.gmra.mxu0 %v1077
  %v1697 = vpop.f32.mrf.mxu0
  %v1698 = vadd.f32 %v1375, %v1697
  %v1699 = vpop.f32.mrf.mxu0
  %v1700 = vadd.f32 %v1377, %v1699
  %1701 = vmatmul.bf16.gmra.mxu0 %v1080
  %v1702 = vpop.f32.mrf.mxu0
  %v1703 = vadd.f32 %v1380, %v1702
  %v1704 = vpop.f32.mrf.mxu0
  %v1705 = vadd.f32 %v1382, %v1704
  %1706 = vmatmul.bf16.gmra.mxu0 %v1083
  %v1707 = vpop.f32.mrf.mxu0
  %v1708 = vadd.f32 %v1385, %v1707
  %v1709 = vpop.f32.mrf.mxu0
  %v1710 = vadd.f32 %v1387, %v1709
  %1711 = vmatmul.bf16.gmra.mxu0 %v1086
  %v1712 = vpop.f32.mrf.mxu0
  %v1713 = vadd.f32 %v1390, %v1712
  %v1714 = vpop.f32.mrf.mxu0
  %v1715 = vadd.f32 %v1392, %v1714
  %1716 = vmatmul.bf16.gmra.mxu0 %v1089
  %v1717 = vpop.f32.mrf.mxu0
  %v1718 = vadd.f32 %v1395, %v1717
  %v1719 = vpop.f32.mrf.mxu0
  %v1720 = vadd.f32 %v1397, %v1719
  %1721 = vmatmul.bf16.gmra.mxu0 %v1092
  %v1722 = vpop.f32.mrf.mxu0
  %v1723 = vadd.f32 %v1400, %v1722
  %v1724 = vpop.f32.mrf.mxu0
  %v1725 = vadd.f32 %v1402, %v1724
  %1726 = vmatmul.bf16.gmra.mxu0 %v1095
  %v1727 = vpop.f32.mrf.mxu0
  %v1728 = vadd.f32 %v1405, %v1727
  %v1729 = vpop.f32.mrf.mxu0
  %v1730 = vadd.f32 %v1407, %v1729
  %1731 = vmatmul.bf16.gmra.mxu0 %v1098
  %v1732 = vpop.f32.mrf.mxu0
  %v1733 = vadd.f32 %v1410, %v1732
  %v1734 = vpop.f32.mrf.mxu0
  %v1735 = vadd.f32 %v1412, %v1734
  %1736 = vmatmul.bf16.gmra.mxu0 %v1101
  %v1737 = vpop.f32.mrf.mxu0
  %v1738 = vadd.f32 %v1415, %v1737
  %v1739 = vpop.f32.mrf.mxu0
  %v1740 = vadd.f32 %v1417, %v1739
  %1741 = vmatmul.bf16.gmra.mxu0 %v1104
  %v1742 = vpop.f32.mrf.mxu0
  %v1743 = vadd.f32 %v1420, %v1742
  %v1744 = vpop.f32.mrf.mxu0
  %v1745 = vadd.f32 %v1422, %v1744
  %1746 = vmatmul.bf16.gmra.mxu0 %v1107
  %v1747 = vpop.f32.mrf.mxu0
  %v1748 = vadd.f32 %v1425, %v1747
  %v1749 = vpop.f32.mrf.mxu0
  %v1750 = vadd.f32 %v1427, %v1749
  %1751 = vmatmul.bf16.gmra.mxu0 %v1110
  %v1752 = vpop.f32.mrf.mxu0
  %v1753 = vadd.f32 %v1430, %v1752
  %v1754 = vpop.f32.mrf.mxu0
  %v1755 = vadd.f32 %v1432, %v1754
  %1756 = vmatmul.bf16.gmra.mxu0 %v1113
  %v1757 = vpop.f32.mrf.mxu0
  %v1758 = vadd.f32 %v1435, %v1757
  %v1759 = vpop.f32.mrf.mxu0
  %1760 = vdwg.mxu0
  %vm1761 = vcmask 1022976
  %1762 = vst.msk [vmem:[%s3] sm:$0xff] %vm1761, %v1448
  %1763 = vst.msk [vmem:[%s3 + $0x8] sm:$0xff] %vm1761, %v1450
  %1764 = vst.msk [vmem:[%s3 + $0x10] sm:$0xff] %vm1761, %v1453
  %1765 = vst.msk [vmem:[%s3 + $0x18] sm:$0xff] %vm1761, %v1455
  %1766 = vst.msk [vmem:[%s3 + $0x20] sm:$0xff] %vm1761, %v1458
  %1767 = vst.msk [vmem:[%s3 + $0x28] sm:$0xff] %vm1761, %v1460
  %1768 = vst.msk [vmem:[%s3 + $0x30] sm:$0xff] %vm1761, %v1463
  %1769 = vst.msk [vmem:[%s3 + $0x38] sm:$0xff] %vm1761, %v1465
  %1770 = vst.msk [vmem:[%s3 + $0x40] sm:$0xff] %vm1761, %v1468
  %1771 = vst.msk [vmem:[%s3 + $0x48] sm:$0xff] %vm1761, %v1470
  %1772 = vst.msk [vmem:[%s3 + $0x50] sm:$0xff] %vm1761, %v1473
  %1773 = vst.msk [vmem:[%s3 + $0x58] sm:$0xff] %vm1761, %v1475
  %1774 = vst.msk [vmem:[%s3 + $0x60] sm:$0xff] %vm1761, %v1478
  %1775 = vst.msk [vmem:[%s3 + $0x68] sm:$0xff] %vm1761, %v1480
  %1776 = vst.msk [vmem:[%s3 + $0x70] sm:$0xff] %vm1761, %v1483
  %1777 = vst.msk [vmem:[%s3 + $0x78] sm:$0xff] %vm1761, %v1485
  %1778 = vst.msk [vmem:[%s3 + $0x80] sm:$0xff] %vm1761, %v1488
  %1779 = vst.msk [vmem:[%s3 + $0x88] sm:$0xff] %vm1761, %v1490
  %1780 = vst.msk [vmem:[%s3 + $0x90] sm:$0xff] %vm1761, %v1493
  %1781 = vst.msk [vmem:[%s3 + $0x98] sm:$0xff] %vm1761, %v1495
  %1782 = vst.msk [vmem:[%s3 + $0xa0] sm:$0xff] %vm1761, %v1498
  %1783 = vst.msk [vmem:[%s3 + $0xa8] sm:$0xff] %vm1761, %v1500
  %1784 = vst.msk [vmem:[%s3 + $0xb0] sm:$0xff] %vm1761, %v1503
  %1785 = vst.msk [vmem:[%s3 + $0xb8] sm:$0xff] %vm1761, %v1505
  %1786 = vst.msk [vmem:[%s3 + $0xc0] sm:$0xff] %vm1761, %v1508
  %1787 = vst.msk [vmem:[%s3 + $0xc8] sm:$0xff] %vm1761, %v1510
  %1788 = vst.msk [vmem:[%s3 + $0xd0] sm:$0xff] %vm1761, %v1513
  %1789 = vst.msk [vmem:[%s3 + $0xd8] sm:$0xff] %vm1761, %v1515
  %1790 = vst.msk [vmem:[%s3 + $0xe0] sm:$0xff] %vm1761, %v1518
  %1791 = vst.msk [vmem:[%s3 + $0xe8] sm:$0xff] %vm1761, %v1520
  %1792 = vst.msk [vmem:[%s3 + $0xf0] sm:$0xff] %vm1761, %v1523
  %1793 = vst.msk [vmem:[%s3 + $0xf8] sm:$0xff] %vm1761, %v1525
  %1794 = vst.msk [vmem:[%s3 + $0x100] sm:$0xff] %vm1761, %v1528
  %1795 = vst.msk [vmem:[%s3 + $0x108] sm:$0xff] %vm1761, %v1530
  %1796 = vst.msk [vmem:[%s3 + $0x110] sm:$0xff] %vm1761, %v1533
  %1797 = vst.msk [vmem:[%s3 + $0x118] sm:$0xff] %vm1761, %v1535
  %1798 = vst.msk [vmem:[%s3 + $0x120] sm:$0xff] %vm1761, %v1538
  %1799 = vst.msk [vmem:[%s3 + $0x128] sm:$0xff] %vm1761, %v1540
  %1800 = vst.msk [vmem:[%s3 + $0x130] sm:$0xff] %vm1761, %v1543
  %1801 = vst.msk [vmem:[%s3 + $0x138] sm:$0xff] %vm1761, %v1545
  %1802 = vst.msk [vmem:[%s3 + $0x140] sm:$0xff] %vm1761, %v1548
  %1803 = vst.msk [vmem:[%s3 + $0x148] sm:$0xff] %vm1761, %v1550
  %1804 = vst.msk [vmem:[%s3 + $0x150] sm:$0xff] %vm1761, %v1553
  %1805 = vst.msk [vmem:[%s3 + $0x158] sm:$0xff] %vm1761, %v1555
  %1806 = vst.msk [vmem:[%s3 + $0x160] sm:$0xff] %vm1761, %v1558
  %1807 = vst.msk [vmem:[%s3 + $0x168] sm:$0xff] %vm1761, %v1560
  %1808 = vst.msk [vmem:[%s3 + $0x170] sm:$0xff] %vm1761, %v1563
  %1809 = vst.msk [vmem:[%s3 + $0x178] sm:$0xff] %vm1761, %v1565
  %1810 = vst.msk [vmem:[%s3 + $0x180] sm:$0xff] %vm1761, %v1568
  %1811 = vst.msk [vmem:[%s3 + $0x188] sm:$0xff] %vm1761, %v1570
  %1812 = vst.msk [vmem:[%s3 + $0x190] sm:$0xff] %vm1761, %v1573
  %1813 = vst.msk [vmem:[%s3 + $0x198] sm:$0xff] %vm1761, %v1575
  %1814 = vst.msk [vmem:[%s3 + $0x1a0] sm:$0xff] %vm1761, %v1578
  %1815 = vst.msk [vmem:[%s3 + $0x1a8] sm:$0xff] %vm1761, %v1580
  %1816 = vst.msk [vmem:[%s3 + $0x1b0] sm:$0xff] %vm1761, %v1583
  %1817 = vst.msk [vmem:[%s3 + $0x1b8] sm:$0xff] %vm1761, %v1585
  %1818 = vst.msk [vmem:[%s3 + $0x1c0] sm:$0xff] %vm1761, %v1588
  %1819 = vst.msk [vmem:[%s3 + $0x1c8] sm:$0xff] %vm1761, %v1590
  %1820 = vst.msk [vmem:[%s3 + $0x1d0] sm:$0xff] %vm1761, %v1593
  %1821 = vst.msk [vmem:[%s3 + $0x1d8] sm:$0xff] %vm1761, %v1595
  %1822 = vst.msk [vmem:[%s3 + $0x1e0] sm:$0xff] %vm1761, %v1598
  %1823 = vst.msk [vmem:[%s3 + $0x1e8] sm:$0xff] %vm1761, %v1600
  %1824 = vst.msk [vmem:[%s3 + $0x1f0] sm:$0xff] %vm1761, %v1603
  %1825 = vst.msk [vmem:[%s3 + $0x1f8] sm:$0xff] %vm1761, %v1605
  %1826 = vst.msk [vmem:[%s3 + $0x200] sm:$0xff] %vm1761, %v1608
  %1827 = vst.msk [vmem:[%s3 + $0x208] sm:$0xff] %vm1761, %v1610
  %1828 = vst.msk [vmem:[%s3 + $0x210] sm:$0xff] %vm1761, %v1613
  %1829 = vst.msk [vmem:[%s3 + $0x218] sm:$0xff] %vm1761, %v1615
  %1830 = vst.msk [vmem:[%s3 + $0x220] sm:$0xff] %vm1761, %v1618
  %1831 = vst.msk [vmem:[%s3 + $0x228] sm:$0xff] %vm1761, %v1620
  %1832 = vst.msk [vmem:[%s3 + $0x230] sm:$0xff] %vm1761, %v1623
  %1833 = vst.msk [vmem:[%s3 + $0x238] sm:$0xff] %vm1761, %v1625
  %1834 = vst.msk [vmem:[%s3 + $0x240] sm:$0xff] %vm1761, %v1628
  %1835 = vst.msk [vmem:[%s3 + $0x248] sm:$0xff] %vm1761, %v1630
  %1836 = vst.msk [vmem:[%s3 + $0x250] sm:$0xff] %vm1761, %v1633
  %1837 = vst.msk [vmem:[%s3 + $0x258] sm:$0xff] %vm1761, %v1635
  %1838 = vst.msk [vmem:[%s3 + $0x260] sm:$0xff] %vm1761, %v1638
  %1839 = vst.msk [vmem:[%s3 + $0x268] sm:$0xff] %vm1761, %v1640
  %1840 = vst.msk [vmem:[%s3 + $0x270] sm:$0xff] %vm1761, %v1643
  %1841 = vst.msk [vmem:[%s3 + $0x278] sm:$0xff] %vm1761, %v1645
  %1842 = vst.msk [vmem:[%s3 + $0x280] sm:$0xff] %vm1761, %v1648
  %1843 = vst.msk [vmem:[%s3 + $0x288] sm:$0xff] %vm1761, %v1650
  %1844 = vst.msk [vmem:[%s3 + $0x290] sm:$0xff] %vm1761, %v1653
  %1845 = vst.msk [vmem:[%s3 + $0x298] sm:$0xff] %vm1761, %v1655
  %1846 = vst.msk [vmem:[%s3 + $0x2a0] sm:$0xff] %vm1761, %v1658
  %1847 = vst.msk [vmem:[%s3 + $0x2a8] sm:$0xff] %vm1761, %v1660
  %1848 = vst.msk [vmem:[%s3 + $0x2b0] sm:$0xff] %vm1761, %v1663
  %1849 = vst.msk [vmem:[%s3 + $0x2b8] sm:$0xff] %vm1761, %v1665
  %1850 = vst.msk [vmem:[%s3 + $0x2c0] sm:$0xff] %vm1761, %v1668
  %1851 = vst.msk [vmem:[%s3 + $0x2c8] sm:$0xff] %vm1761, %v1670
  %1852 = vst.msk [vmem:[%s3 + $0x2d0] sm:$0xff] %vm1761, %v1673
  %1853 = vst.msk [vmem:[%s3 + $0x2d8] sm:$0xff] %vm1761, %v1675
  %1854 = vst.msk [vmem:[%s3 + $0x2e0] sm:$0xff] %vm1761, %v1678
  %1855 = vst.msk [vmem:[%s3 + $0x2e8] sm:$0xff] %vm1761, %v1680
  %1856 = vst.msk [vmem:[%s3 + $0x2f0] sm:$0xff] %vm1761, %v1683
  %1857 = vst.msk [vmem:[%s3 + $0x2f8] sm:$0xff] %vm1761, %v1685
  %1858 = vst.msk [vmem:[%s3 + $0x300] sm:$0xff] %vm1761, %v1688
  %1859 = vst.msk [vmem:[%s3 + $0x308] sm:$0xff] %vm1761, %v1690
  %1860 = vst.msk [vmem:[%s3 + $0x310] sm:$0xff] %vm1761, %v1693
  %1861 = vst.msk [vmem:[%s3 + $0x318] sm:$0xff] %vm1761, %v1695
  %1862 = vst.msk [vmem:[%s3 + $0x320] sm:$0xff] %vm1761, %v1698
  %1863 = vst.msk [vmem:[%s3 + $0x328] sm:$0xff] %vm1761, %v1700
  %1864 = vst.msk [vmem:[%s3 + $0x330] sm:$0xff] %vm1761, %v1703
  %1865 = vst.msk [vmem:[%s3 + $0x338] sm:$0xff] %vm1761, %v1705
  %1866 = vst.msk [vmem:[%s3 + $0x340] sm:$0xff] %vm1761, %v1708
  %1867 = vst.msk [vmem:[%s3 + $0x348] sm:$0xff] %vm1761, %v1710
  %1868 = vst.msk [vmem:[%s3 + $0x350] sm:$0xff] %vm1761, %v1713
  %1869 = vst.msk [vmem:[%s3 + $0x358] sm:$0xff] %vm1761, %v1715
  %1870 = vst.msk [vmem:[%s3 + $0x360] sm:$0xff] %vm1761, %v1718
  %1871 = vst.msk [vmem:[%s3 + $0x368] sm:$0xff] %vm1761, %v1720
  %1872 = vst.msk [vmem:[%s3 + $0x370] sm:$0xff] %vm1761, %v1723
  %1873 = vst.msk [vmem:[%s3 + $0x378] sm:$0xff] %vm1761, %v1725
  %1874 = vst.msk [vmem:[%s3 + $0x380] sm:$0xff] %vm1761, %v1728
  %1875 = vst.msk [vmem:[%s3 + $0x388] sm:$0xff] %vm1761, %v1730
  %1876 = vst.msk [vmem:[%s3 + $0x390] sm:$0xff] %vm1761, %v1733
  %1877 = vst.msk [vmem:[%s3 + $0x398] sm:$0xff] %vm1761, %v1735
  %1878 = vst.msk [vmem:[%s3 + $0x3a0] sm:$0xff] %vm1761, %v1738
  %1879 = vst.msk [vmem:[%s3 + $0x3a8] sm:$0xff] %vm1761, %v1740
  %1880 = vst.msk [vmem:[%s3 + $0x3b0] sm:$0xff] %vm1761, %v1743
  %1881 = vst.msk [vmem:[%s3 + $0x3b8] sm:$0xff] %vm1761, %v1745
  %1882 = vst.msk [vmem:[%s3 + $0x3c0] sm:$0xff] %vm1761, %v1748
  %1883 = vst.msk [vmem:[%s3 + $0x3c8] sm:$0xff] %vm1761, %v1750
  %1884 = vst.msk [vmem:[%s3 + $0x3d0] sm:$0xff] %vm1761, %v1753
  %1885 = vst.msk [vmem:[%s3 + $0x3d8] sm:$0xff] %vm1761, %v1755
  %1886 = vst.msk [vmem:[%s3 + $0x3e0] sm:$0xff] %vm1761, %v1758
  // Predicated region
  $region14: #{_lambda_.3} parent=0 // pred_check
    _
  $region15: #{_lambda_.3} parent=0 // pred_check_branch
    %1888 = sbr.rel (0) target = $region17
  $region16: #{_lambda_.3} parent=0 // pred_region
    _
  $region17: #{_lambda_.3} parent=0 // pred_fallthru
    _
  // Predicated region
  $region18: #{_lambda_.3} parent=0 // pred_check
    _
  $region19: #{_lambda_.3} parent=0 // pred_check_branch
    %1890 = sbr.rel (0) target = $region21
  $region20: #{_lambda_.3} parent=0 // pred_region
    _
  $region21: #{_lambda_.3} parent=0 // pred_fallthru
    _

</llo_original>
